<compile_context>
chip_gen: v7x
topology: tpu7x:2x2x1
jax: 0.10.0
libtpu: 0.0.40
codegen_flags: <defaults>
</compile_context>

<pallas_src>
import functools

import jax
import jax.numpy as jnp
import numpy as np
from jax.experimental import pallas as pl
from jax.experimental.pallas import tpu as pltpu


def _round_up(x, m):
    return ((x + m - 1) // m) * m


def _device_kind():
    try:
        return jax.devices()[0].device_kind.lower()
    except Exception:
        return ""


def _sigmoid_eup(x):
    # sigma(x) = 0.5*(tanh(x/2)+1): single EUP op, no f32 divide (the divide is
    # the first slot to saturate on v6e/v7x at scale; harmless on v5e).
    return 0.5 * (jnp.tanh(0.5 * x) + 1.0)


def _pick_tb(B, N, target_rows, want_grid):
    """Largest divisor of B with TB*N <= target_rows, keeping grid >= want_grid."""
    divs = [t for t in range(1, B + 1) if B % t == 0]
    fits = [t for t in divs if t * N <= target_rows] or [1]
    tb = max(fits)
    if want_grid > 1:
        ok = [t for t in fits if B // t >= want_grid]
        if ok:
            tb = max(ok)  # v7x: shard grid across both TensorCores
    return tb


def _graph_layer_kernel(x_ref, adjbd_ref, mask_ref,
                        enc_w_ref, enc_b_ref,
                        wg_ref, bg_ref,          # [[Wz0|Wr0|Wh0],[Wz1|Wr1|0]], [bz0+bz1|br0+br1|bh0+bh1]
                        wh1_ref,                 # Wh1  (bh1 already folded into bg)
                        out_ref,
                        *, gru_step, fuse_gate_k):
    # Block shapes (per grid step):
    #   x: (TB, N, Din_p)  adj_bd: (1, R, R)  mask: (TB, N, 1)  out: (TB, N, D)
    cdt = x_ref.dtype                          # MXU operand dtype (f32 or bf16)
    TB, N, _ = x_ref.shape
    D = out_ref.shape[-1]
    R = TB * N                                 # stacked rows -> fills the MXU

    # Hoisted mask broadcast (JAX does not CSE broadcast_in_dim).
    mask_full = jnp.broadcast_to(mask_ref[...].reshape(R, 1), (R, D))

    # --- encode: state = mask * tanh(x @ Wenc + benc) ------------------------
    # TODO(synk): dropout_p=0.0 (eval semantics) -> dropout on feature/adj omitted.
    x2 = x_ref[...].reshape(R, -1)             # (R, Din_p)
    enc = jnp.dot(x2, enc_w_ref[...],
                  preferred_element_type=jnp.float32) + enc_b_ref[...]
    state = mask_full * jnp.tanh(enc)          # (R, D) f32

    adj_bd = adjbd_ref[0]                      # (R, R) block-diagonal, compute dtype
    bg = bg_ref[...]                           # (1, 3D) f32

    def gru_body(_, state):
        # a = adj @ state : one block-diagonal matmul instead of TB tiny ones.
        a = jnp.dot(adj_bd, state.astype(cdt),
                    preferred_element_type=jnp.float32)            # (R, D) f32
        a_c = a.astype(cdt)
        s_c = state.astype(cdt)
        if fuse_gate_k:
            # Single K=2D contraction -> exact fill of the 256-deep MXU.
            ls = jnp.concatenate([a_c, s_c], axis=-1)               # (R, 2D)
            g = jnp.dot(ls, wg_ref[...],
                        preferred_element_type=jnp.float32) + bg    # (R, 3D)
            z_pre = g[:, 0:D]
            r_pre = g[:, D:2 * D]
            h_pre = g[:, 2 * D:3 * D]
        else:
            # v5e: K=128 already fills the 4x128^2 MXU; skip the fusion FLOPs.
            g0 = jnp.dot(a_c, wg_ref[0:D, :],
                         preferred_element_type=jnp.float32)        # (R, 3D)
            g1 = jnp.dot(s_c, wg_ref[D:2 * D, 0:2 * D],
                         preferred_element_type=jnp.float32)        # (R, 2D)
            z_pre = g0[:, 0:D] + g1[:, 0:D] + bg[:, 0:D]
            r_pre = g0[:, D:2 * D] + g1[:, D:2 * D] + bg[:, D:2 * D]
            h_pre = g0[:, 2 * D:3 * D] + bg[:, 2 * D:3 * D]

        # Consume r immediately (lower vreg pressure), then z.
        r = _sigmoid_eup(r_pre)
        h1 = jnp.dot((r * state).astype(cdt), wh1_ref[...],
                     preferred_element_type=jnp.float32)            # bh1 folded in bg
        h = jnp.tanh(mask_full * (h_pre + h1))
        z = _sigmoid_eup(z_pre)
        return state + z * (h - state)          # == h*z + state*(1-z), 1 fewer vmul

    if gru_step <= 4:
        for _ in range(gru_step):
            state = gru_body(0, state)
    else:
        state = jax.lax.fori_loop(0, gru_step, gru_body, state)

    out_ref[...] = state.reshape(TB, N, D).astype(out_ref.dtype)


def prepare_graph_layer_params(params, input_dim, output_dim,
                               compute_dtype=jnp.float32):
    """One-time weight prep (pad to lane-dense 128 multiples, fuse, fold biases)."""
    Din_p = _round_up(input_dim, 128)
    D = _round_up(output_dim, 128)
    f32 = jnp.float32

    def padw(w):
        return jnp.pad(w.astype(f32), ((0, D - w.shape[0]), (0, D - w.shape[1])))

    def padb(b):
        b = b.astype(f32).reshape(1, -1)
        return jnp.pad(b, ((0, 0), (0, D - b.shape[-1])))

    enc_w = jnp.pad(params["enc_w"].astype(f32),
                    ((0, Din_p - input_dim), (0, D - output_dim))).astype(compute_dtype)
    enc_b = padb(params["enc_b"])

    # Stacked gate weight: [[Wz0 | Wr0 | Wh0],
    #                       [Wz1 | Wr1 |  0 ]]   shape (2D, 3D)
    top = jnp.concatenate([padw(params["z0_w"]), padw(params["r0_w"]),
                           padw(params["h0_w"])], axis=1)
    bot = jnp.concatenate([padw(params["z1_w"]), padw(params["r1_w"]),
                           jnp.zeros((D, D), f32)], axis=1)
    wg = jnp.concatenate([top, bot], axis=0).astype(compute_dtype)

    # Folded biases: [bz0+bz1 | br0+br1 | bh0+bh1]
    bg = jnp.concatenate([padb(params["z0_b"]) + padb(params["z1_b"]),
                          padb(params["r0_b"]) + padb(params["r1_b"]),
                          padb(params["h0_b"]) + padb(params["h1_b"])], axis=1)

    wh1 = padw(params["h1_w"]).astype(compute_dtype)

    return {"enc_w": enc_w, "enc_b": enc_b, "wg": wg, "bg": bg, "wh1": wh1}


def _graph_layer_forward(feature, adj, mask, prepared, *, gru_step, out_dim,
                         compute_dtype):
    B, N, Din = feature.shape
    Din_p = prepared["enc_w"].shape[0]
    D = prepared["wh1"].shape[0]
    f32 = jnp.float32

    kind = _device_kind()
    is_v5e = "v5" in kind
    fuse_gate_k = not is_v5e                 # K=2D fusion only pays on 256-deep MXUs
    want_grid = 2 if "v7" in kind else 1     # v7x: keep both TensorCores busy
    TB = _pick_tb(B, N, target_rows=(128 if is_v5e else 256), want_grid=want_grid)
    G = B // TB
    R = TB * N

    # Data-dependent layout (runs inside the surrounding jit, fused with the call).
    x_p = jnp.pad(feature.astype(f32),
                  ((0, 0), (0, 0), (0, Din_p - Din))).astype(compute_dtype)
    mask_f = mask.astype(f32)
    adj_f = adj.astype(f32)
    if TB == 1:
        adj_bd = adj_f.reshape(G, R, R)
    else:
        # Block-diagonal adjacency per group of TB graphs -> one (R,R)@(R,D)
        # matmul per GRU step instead of TB tiny per-graph matmuls.
        eye = jnp.eye(TB, dtype=f32)
        adj_bd = jnp.einsum('gbij,bc->gbicj',
                            adj_f.reshape(G, TB, N, N), eye).reshape(G, R, R)
    adj_bd = adj_bd.astype(compute_dtype)

    itemsize = jnp.dtype(compute_dtype).itemsize
    weight_bytes = (Din_p * D + 2 * D * 3 * D + D * D) * itemsize + 4 * D * 4
    block_bytes = (TB * N * Din_p * itemsize + R * R * itemsize
                   + TB * N * 4 + TB * N * D * 4)
    vmem_needed = 2 * (block_bytes + weight_bytes)      # double-buffered
    vmem_limit = int(min(64 << 20, max(16 << 20, 4 * vmem_needed)))
    # NOTE: when scaling N/D (esp. on v7x's 64 MiB VMEM), consider
    # pipeline_mode=pl.Buffered(1) on the grid-invariant weight BlockSpecs.

    gate_flops = (2 * B * N * (2 * D) * (3 * D) if fuse_gate_k
                  else 2 * B * N * D * (3 * D) + 2 * B * N * D * (2 * D))
    flops = int(2 * B * N * Din_p * D
                + gru_step * (2 * B * N * R * D + gate_flops + 2 * B * N * D * D))
    transcendentals = int(B * N * D * (1 + 3 * gru_step))
    bytes_accessed = int(B * N * Din_p * itemsize + G * R * R * itemsize
                         + B * N * 4 + G * weight_bytes + B * N * D * 4)

    kernel = functools.partial(_graph_layer_kernel, gru_step=gru_step,
                               fuse_gate_k=fuse_gate_k)

    out_p = pl.pallas_call(
        kernel,
        out_shape=jax.ShapeDtypeStruct((B, N, D), jnp.float32),
        grid_spec=pltpu.PrefetchScalarGridSpec(
            num_scalar_prefetch=0,
            grid=(G,),
            in_specs=[
                pl.BlockSpec((TB, N, Din_p), lambda i: (i, 0, 0)),   # feature
                pl.BlockSpec((1, R, R), lambda i: (i, 0, 0)),        # block-diag adj
                pl.BlockSpec((TB, N, 1), lambda i: (i, 0, 0)),       # mask
                # Grid-invariant parameters (constant index_map -> no re-blocking).
                pl.BlockSpec((Din_p, D), lambda i: (0, 0)),          # enc_w
                pl.BlockSpec((1, D), lambda i: (0, 0)),              # enc_b
                pl.BlockSpec((2 * D, 3 * D), lambda i: (0, 0)),      # stacked gate W
                pl.BlockSpec((1, 3 * D), lambda i: (0, 0)),          # folded gate b
                pl.BlockSpec((D, D), lambda i: (0, 0)),              # Wh1
            ],
            out_specs=pl.BlockSpec((TB, N, D), lambda i: (i, 0, 0)),
        ),
        compiler_params=pltpu.CompilerParams(
            dimension_semantics=("parallel",),
            vmem_limit_bytes=vmem_limit,
        ),
        cost_estimate=pl.CostEstimate(flops=flops,
                                      transcendentals=transcendentals,
                                      bytes_accessed=bytes_accessed),
    )(x_p, adj_bd, mask_f,
      prepared["enc_w"], prepared["enc_b"],
      prepared["wg"], prepared["bg"], prepared["wh1"])

    return out_p[..., :out_dim]


def build_graph_layer_forward(params, input_dim, output_dim, *, gru_step,
                              compute_dtype=jnp.float32):
    """Prepare weights once; return a jitted forward(feature, adj, mask)."""
    prepared = prepare_graph_layer_params(params, input_dim, output_dim,
                                          compute_dtype=compute_dtype)
    fwd = jax.jit(functools.partial(_graph_layer_forward, gru_step=gru_step,
                                    out_dim=output_dim,
                                    compute_dtype=compute_dtype))
    return lambda feature, adj, mask: fwd(feature, adj, mask, prepared)


def _reference(feature, adj, mask, p, gru_step):
    def sig(x):
        return 1.0 / (1.0 + jnp.exp(-x))
    out = mask * jnp.tanh(jnp.matmul(feature, p["enc_w"]) + p["enc_b"])
    for _ in range(gru_step):
        a = jnp.matmul(adj, out)
        z = sig(a @ p["z0_w"] + p["z0_b"] + out @ p["z1_w"] + p["z1_b"])
        r = sig(a @ p["r0_w"] + p["r0_b"] + out @ p["r1_w"] + p["r1_b"])
        h0 = a @ p["h0_w"] + p["h0_b"]
        h1 = (r * out) @ p["h1_w"] + p["h1_b"]
        h = jnp.tanh(mask * (h0 + h1))
        out = h * z + out * (1.0 - z)
    return out


if __name__ == "__main__":
    key = jax.random.PRNGKey(0)
    B, N, Din, Dout, GRU_STEP = 2, 16, 32, 32, 2

    keys = jax.random.split(key, 20)

    def glorot(k, din, dout):
        lim = float(np.sqrt(6.0 / (din + dout)))
        return jax.random.uniform(k, (din, dout), jnp.float32, -lim, lim)

    def uniform_bias(k, dout):
        lim = 1.0 / float(np.sqrt(dout))
        return jax.random.uniform(k, (1, dout), jnp.float32, -lim, lim)

    params = {
        "enc_w": glorot(keys[3], Din, Dout), "enc_b": uniform_bias(keys[4], Dout),
        "z0_w": glorot(keys[5], Dout, Dout), "z0_b": uniform_bias(keys[6], Dout),
        "z1_w": glorot(keys[7], Dout, Dout), "z1_b": uniform_bias(keys[8], Dout),
        "r0_w": glorot(keys[9], Dout, Dout), "r0_b": uniform_bias(keys[10], Dout),
        "r1_w": glorot(keys[11], Dout, Dout), "r1_b": uniform_bias(keys[12], Dout),
        "h0_w": glorot(keys[13], Dout, Dout), "h0_b": uniform_bias(keys[14], Dout),
        "h1_w": glorot(keys[15], Dout, Dout), "h1_b": uniform_bias(keys[16], Dout),
    }

    feature = jax.random.normal(keys[0], (B, N, Din), dtype=jnp.float32)
    adj_raw = jax.random.uniform(keys[1], (B, N, N), dtype=jnp.float32)
    adj = adj_raw / jnp.sum(adj_raw, axis=-1, keepdims=True)
    mask = (jax.random.uniform(keys[2], (B, N, 1)) > 0.25).astype(jnp.float32)

    ref = _reference(feature, adj, mask, params, GRU_STEP)

    # f32 path (accuracy check).
    fwd_f32 = build_graph_layer_forward(params, Din, Dout, gru_step=GRU_STEP)
    out = jax.block_until_ready(fwd_f32(feature, adj, mask))
    np.testing.assert_allclose(np.asarray(out), np.asarray(ref),
                               rtol=5e-4, atol=5e-4)

    # bf16 operand path (v6e/v7x MXU-native); accumulation stays f32.
    fwd_bf16 = build_graph_layer_forward(params, Din, Dout, gru_step=GRU_STEP,
                                         compute_dtype=jnp.bfloat16)
    out_bf16 = jax.block_until_ready(fwd_bf16(feature, adj, mask))
    np.testing.assert_allclose(np.asarray(out_bf16), np.asarray(ref),
                               rtol=0.0, atol=1e-1)

    print("KERNEL_OK")
</pallas_src>

<mosaic_0001>
module attributes {stable_mosaic.version = 11 : i64} {
  func.func @_graph_layer_kernel(%arg0: i32, %arg1: memref<2x16x128xf32, #tpu.memory_space<vmem>>, %arg2: memref<1x32x32xf32, #tpu.memory_space<vmem>>, %arg3: memref<2x16x1xf32, #tpu.memory_space<vmem>>, %arg4: memref<128x128xf32, #tpu.memory_space<vmem>>, %arg5: memref<1x128xf32, #tpu.memory_space<vmem>>, %arg6: memref<256x384xf32, #tpu.memory_space<vmem>>, %arg7: memref<1x384xf32, #tpu.memory_space<vmem>>, %arg8: memref<128x128xf32, #tpu.memory_space<vmem>>, %arg9: memref<2x16x128xf32, #tpu.memory_space<vmem>>) attributes {dimension_semantics = [#tpu.dimension_semantics<parallel>], iteration_bounds = array<i64: 1>, scalar_prefetch = 0 : i64, scratch_operands = 0 : i64, tpu.core_type = #tpu.core_type<tc>, window_params = [{transform_indices = @transform_0, window_bounds = array<i64: 2, 16, 128>}, {transform_indices = @transform_1, window_bounds = array<i64: 1, 32, 32>}, {transform_indices = @transform_2, window_bounds = array<i64: 2, 16, 1>}, {pipeline_mode = #tpu.pipeline_mode<synchronous>, transform_indices = @transform_3, window_bounds = array<i64: 128, 128>}, {pipeline_mode = #tpu.pipeline_mode<synchronous>, transform_indices = @transform_4, window_bounds = array<i64: 1, 128>}, {pipeline_mode = #tpu.pipeline_mode<synchronous>, transform_indices = @transform_5, window_bounds = array<i64: 256, 384>}, {pipeline_mode = #tpu.pipeline_mode<synchronous>, transform_indices = @transform_6, window_bounds = array<i64: 1, 384>}, {pipeline_mode = #tpu.pipeline_mode<synchronous>, transform_indices = @transform_7, window_bounds = array<i64: 128, 128>}, {transform_indices = @transform_8, window_bounds = array<i64: 2, 16, 128>}]} {
    %c0 = arith.constant 0 : index
    %c0_0 = arith.constant 0 : index
    %c0_1 = arith.constant 0 : index
    %0 = vector.load %arg3[%c0, %c0_0, %c0_1] : memref<2x16x1xf32, #tpu.memory_space<vmem>>, vector<2x16x1xf32>
    %1 = vector.shape_cast %0 : vector<2x16x1xf32> to vector<32x1xf32>
    %2 = vector.shape_cast %1 : vector<32x1xf32> to vector<32x1xf32>
    %3 = vector.broadcast %2 : vector<32x1xf32> to vector<32x128xf32>
    %c0_2 = arith.constant 0 : index
    %c0_3 = arith.constant 0 : index
    %c0_4 = arith.constant 0 : index
    %4 = vector.load %arg1[%c0_2, %c0_3, %c0_4] : memref<2x16x128xf32, #tpu.memory_space<vmem>>, vector<2x16x128xf32>
    %5 = vector.shape_cast %4 : vector<2x16x128xf32> to vector<32x128xf32>
    %c0_5 = arith.constant 0 : index
    %c0_6 = arith.constant 0 : index
    %6 = vector.load %arg4[%c0_5, %c0_6] : memref<128x128xf32, #tpu.memory_space<vmem>>, vector<128x128xf32>
    %cst = arith.constant dense<0.000000e+00> : vector<32x128xf32>
    %7 = tpu.matmul %5, %6, %cst {dimension_numbers = #tpu.dot_dimension_numbers<[1], [0], [0], [1], [0, 0, 1, 1], [], []>} : vector<32x128xf32>, vector<128x128xf32>, vector<32x128xf32> -> vector<32x128xf32>
    %c0_7 = arith.constant 0 : index
    %c0_8 = arith.constant 0 : index
    %8 = vector.load %arg5[%c0_7, %c0_8] : memref<1x128xf32, #tpu.memory_space<vmem>>, vector<1x128xf32>
    %9 = vector.broadcast %8 : vector<1x128xf32> to vector<32x128xf32>
    %10 = arith.addf %7, %9 : vector<32x128xf32>
    %11 = math.tanh %10 : vector<32x128xf32>
    %12 = arith.mulf %3, %11 : vector<32x128xf32>
    %c0_9 = arith.constant 0 : index
    %c0_10 = arith.constant 0 : index
    %c0_11 = arith.constant 0 : index
    %13 = vector.load %arg2[%c0_9, %c0_10, %c0_11] : memref<1x32x32xf32, #tpu.memory_space<vmem>>, vector<1x32x32xf32>
    %14 = vector.shape_cast %13 : vector<1x32x32xf32> to vector<32x32xf32>
    %c0_12 = arith.constant 0 : index
    %c0_13 = arith.constant 0 : index
    %15 = vector.load %arg7[%c0_12, %c0_13] : memref<1x384xf32, #tpu.memory_space<vmem>>, vector<1x384xf32>
    %cst_14 = arith.constant dense<0.000000e+00> : vector<32x128xf32>
    %16 = tpu.matmul %14, %12, %cst_14 {dimension_numbers = #tpu.dot_dimension_numbers<[1], [0], [0], [1], [0, 0, 1, 1], [], []>} : vector<32x32xf32>, vector<32x128xf32>, vector<32x128xf32> -> vector<32x128xf32>
    %17 = tpu.concatenate %16, %12 in 1 : vector<32x128xf32>, vector<32x128xf32> -> vector<32x256xf32>
    %c0_15 = arith.constant 0 : index
    %c0_16 = arith.constant 0 : index
    %18 = vector.load %arg6[%c0_15, %c0_16] : memref<256x384xf32, #tpu.memory_space<vmem>>, vector<256x384xf32>
    %cst_17 = arith.constant dense<0.000000e+00> : vector<32x384xf32>
    %19 = tpu.matmul %17, %18, %cst_17 {dimension_numbers = #tpu.dot_dimension_numbers<[1], [0], [0], [1], [0, 0, 1, 1], [], []>} : vector<32x256xf32>, vector<256x384xf32>, vector<32x384xf32> -> vector<32x384xf32>
    %20 = vector.broadcast %15 : vector<1x384xf32> to vector<32x384xf32>
    %21 = arith.addf %19, %20 : vector<32x384xf32>
    %22 = vector.extract_strided_slice %21 {offsets = [0, 0], sizes = [32, 128], strides = [1, 1]} : vector<32x384xf32> to vector<32x128xf32>
    %23 = vector.extract_strided_slice %21 {offsets = [0, 128], sizes = [32, 128], strides = [1, 1]} : vector<32x384xf32> to vector<32x128xf32>
    %24 = vector.extract_strided_slice %21 {offsets = [0, 256], sizes = [32, 128], strides = [1, 1]} : vector<32x384xf32> to vector<32x128xf32>
    %cst_18 = arith.constant 5.000000e-01 : f32
    %25 = vector.broadcast %cst_18 : f32 to vector<32x128xf32>
    %26 = arith.mulf %25, %23 : vector<32x128xf32>
    %27 = math.tanh %26 : vector<32x128xf32>
    %cst_19 = arith.constant 1.000000e+00 : f32
    %28 = vector.broadcast %cst_19 : f32 to vector<32x128xf32>
    %29 = arith.addf %27, %28 : vector<32x128xf32>
    %cst_20 = arith.constant 5.000000e-01 : f32
    %30 = vector.broadcast %cst_20 : f32 to vector<32x128xf32>
    %31 = arith.mulf %30, %29 : vector<32x128xf32>
    %32 = arith.mulf %31, %12 : vector<32x128xf32>
    %c0_21 = arith.constant 0 : index
    %c0_22 = arith.constant 0 : index
    %33 = vector.load %arg8[%c0_21, %c0_22] : memref<128x128xf32, #tpu.memory_space<vmem>>, vector<128x128xf32>
    %cst_23 = arith.constant dense<0.000000e+00> : vector<32x128xf32>
    %34 = tpu.matmul %32, %33, %cst_23 {dimension_numbers = #tpu.dot_dimension_numbers<[1], [0], [0], [1], [0, 0, 1, 1], [], []>} : vector<32x128xf32>, vector<128x128xf32>, vector<32x128xf32> -> vector<32x128xf32>
    %35 = arith.addf %24, %34 : vector<32x128xf32>
    %36 = arith.mulf %3, %35 : vector<32x128xf32>
    %37 = math.tanh %36 : vector<32x128xf32>
    %cst_24 = arith.constant 5.000000e-01 : f32
    %38 = vector.broadcast %cst_24 : f32 to vector<32x128xf32>
    %39 = arith.mulf %38, %22 : vector<32x128xf32>
    %40 = math.tanh %39 : vector<32x128xf32>
    %cst_25 = arith.constant 1.000000e+00 : f32
    %41 = vector.broadcast %cst_25 : f32 to vector<32x128xf32>
    %42 = arith.addf %40, %41 : vector<32x128xf32>
    %cst_26 = arith.constant 5.000000e-01 : f32
    %43 = vector.broadcast %cst_26 : f32 to vector<32x128xf32>
    %44 = arith.mulf %43, %42 : vector<32x128xf32>
    %45 = arith.subf %37, %12 : vector<32x128xf32>
    %46 = arith.mulf %44, %45 : vector<32x128xf32>
    %47 = arith.addf %12, %46 : vector<32x128xf32>
    %cst_27 = arith.constant dense<0.000000e+00> : vector<32x128xf32>
    %48 = tpu.matmul %14, %47, %cst_27 {dimension_numbers = #tpu.dot_dimension_numbers<[1], [0], [0], [1], [0, 0, 1, 1], [], []>} : vector<32x32xf32>, vector<32x128xf32>, vector<32x128xf32> -> vector<32x128xf32>
    %49 = tpu.concatenate %48, %47 in 1 : vector<32x128xf32>, vector<32x128xf32> -> vector<32x256xf32>
    %c0_28 = arith.constant 0 : index
    %c0_29 = arith.constant 0 : index
    %50 = vector.load %arg6[%c0_28, %c0_29] : memref<256x384xf32, #tpu.memory_space<vmem>>, vector<256x384xf32>
    %cst_30 = arith.constant dense<0.000000e+00> : vector<32x384xf32>
    %51 = tpu.matmul %49, %50, %cst_30 {dimension_numbers = #tpu.dot_dimension_numbers<[1], [0], [0], [1], [0, 0, 1, 1], [], []>} : vector<32x256xf32>, vector<256x384xf32>, vector<32x384xf32> -> vector<32x384xf32>
    %52 = vector.broadcast %15 : vector<1x384xf32> to vector<32x384xf32>
    %53 = arith.addf %51, %52 : vector<32x384xf32>
    %54 = vector.extract_strided_slice %53 {offsets = [0, 0], sizes = [32, 128], strides = [1, 1]} : vector<32x384xf32> to vector<32x128xf32>
    %55 = vector.extract_strided_slice %53 {offsets = [0, 128], sizes = [32, 128], strides = [1, 1]} : vector<32x384xf32> to vector<32x128xf32>
    %56 = vector.extract_strided_slice %53 {offsets = [0, 256], sizes = [32, 128], strides = [1, 1]} : vector<32x384xf32> to vector<32x128xf32>
    %cst_31 = arith.constant 5.000000e-01 : f32
    %57 = vector.broadcast %cst_31 : f32 to vector<32x128xf32>
    %58 = arith.mulf %57, %55 : vector<32x128xf32>
    %59 = math.tanh %58 : vector<32x128xf32>
    %cst_32 = arith.constant 1.000000e+00 : f32
    %60 = vector.broadcast %cst_32 : f32 to vector<32x128xf32>
    %61 = arith.addf %59, %60 : vector<32x128xf32>
    %cst_33 = arith.constant 5.000000e-01 : f32
    %62 = vector.broadcast %cst_33 : f32 to vector<32x128xf32>
    %63 = arith.mulf %62, %61 : vector<32x128xf32>
    %64 = arith.mulf %63, %47 : vector<32x128xf32>
    %c0_34 = arith.constant 0 : index
    %c0_35 = arith.constant 0 : index
    %65 = vector.load %arg8[%c0_34, %c0_35] : memref<128x128xf32, #tpu.memory_space<vmem>>, vector<128x128xf32>
    %cst_36 = arith.constant dense<0.000000e+00> : vector<32x128xf32>
    %66 = tpu.matmul %64, %65, %cst_36 {dimension_numbers = #tpu.dot_dimension_numbers<[1], [0], [0], [1], [0, 0, 1, 1], [], []>} : vector<32x128xf32>, vector<128x128xf32>, vector<32x128xf32> -> vector<32x128xf32>
    %67 = arith.addf %56, %66 : vector<32x128xf32>
    %68 = arith.mulf %3, %67 : vector<32x128xf32>
    %69 = math.tanh %68 : vector<32x128xf32>
    %cst_37 = arith.constant 5.000000e-01 : f32
    %70 = vector.broadcast %cst_37 : f32 to vector<32x128xf32>
    %71 = arith.mulf %70, %54 : vector<32x128xf32>
    %72 = math.tanh %71 : vector<32x128xf32>
    %cst_38 = arith.constant 1.000000e+00 : f32
    %73 = vector.broadcast %cst_38 : f32 to vector<32x128xf32>
    %74 = arith.addf %72, %73 : vector<32x128xf32>
    %cst_39 = arith.constant 5.000000e-01 : f32
    %75 = vector.broadcast %cst_39 : f32 to vector<32x128xf32>
    %76 = arith.mulf %75, %74 : vector<32x128xf32>
    %77 = arith.subf %69, %47 : vector<32x128xf32>
    %78 = arith.mulf %76, %77 : vector<32x128xf32>
    %79 = arith.addf %47, %78 : vector<32x128xf32>
    %80 = vector.shape_cast %79 : vector<32x128xf32> to vector<2x16x128xf32>
    %c0_40 = arith.constant 0 : index
    %c0_41 = arith.constant 0 : index
    %c0_42 = arith.constant 0 : index
    %81 = vector.load %arg9[%c0_40, %c0_41, %c0_42] : memref<2x16x128xf32, #tpu.memory_space<vmem>>, vector<2x16x128xf32>
    tpu.vector_store %arg9[%c0_40, %c0_41, %c0_42], %80 {strides = array<i32>} : memref<2x16x128xf32, #tpu.memory_space<vmem>>, vector<2x16x128xf32>,
    return
  }
  func.func @transform_0(%arg0: i32) -> (i32, i32, i32) {
    %c0_i32 = arith.constant 0 : i32
    %c0_i32_0 = arith.constant 0 : i32
    %c0_i32_1 = arith.constant 0 : i32
    return %arg0, %c0_i32, %c0_i32_0 : i32, i32, i32
  }
  func.func @transform_1(%arg0: i32) -> (i32, i32, i32) {
    %c0_i32 = arith.constant 0 : i32
    %c0_i32_0 = arith.constant 0 : i32
    %c0_i32_1 = arith.constant 0 : i32
    return %arg0, %c0_i32, %c0_i32_0 : i32, i32, i32
  }
  func.func @transform_2(%arg0: i32) -> (i32, i32, i32) {
    %c0_i32 = arith.constant 0 : i32
    %c0_i32_0 = arith.constant 0 : i32
    %c0_i32_1 = arith.constant 0 : i32
    return %arg0, %c0_i32, %c0_i32_0 : i32, i32, i32
  }
  func.func @transform_3(%arg0: i32) -> (i32, i32) {
    %c0_i32 = arith.constant 0 : i32
    %c0_i32_0 = arith.constant 0 : i32
    %c0_i32_1 = arith.constant 0 : i32
    return %c0_i32, %c0_i32_0 : i32, i32
  }
  func.func @transform_4(%arg0: i32) -> (i32, i32) {
    %c0_i32 = arith.constant 0 : i32
    %c0_i32_0 = arith.constant 0 : i32
    %c0_i32_1 = arith.constant 0 : i32
    return %c0_i32, %c0_i32_0 : i32, i32
  }
  func.func @transform_5(%arg0: i32) -> (i32, i32) {
    %c0_i32 = arith.constant 0 : i32
    %c0_i32_0 = arith.constant 0 : i32
    %c0_i32_1 = arith.constant 0 : i32
    return %c0_i32, %c0_i32_0 : i32, i32
  }
  func.func @transform_6(%arg0: i32) -> (i32, i32) {
    %c0_i32 = arith.constant 0 : i32
    %c0_i32_0 = arith.constant 0 : i32
    %c0_i32_1 = arith.constant 0 : i32
    return %c0_i32, %c0_i32_0 : i32, i32
  }
  func.func @transform_7(%arg0: i32) -> (i32, i32) {
    %c0_i32 = arith.constant 0 : i32
    %c0_i32_0 = arith.constant 0 : i32
    %c0_i32_1 = arith.constant 0 : i32
    return %c0_i32, %c0_i32_0 : i32, i32
  }
  func.func @transform_8(%arg0: i32) -> (i32, i32, i32) {
    %c0_i32 = arith.constant 0 : i32
    %c0_i32_0 = arith.constant 0 : i32
    %c0_i32_1 = arith.constant 0 : i32
    return %arg0, %c0_i32, %c0_i32_0 : i32, i32, i32
  }
}

</mosaic_0001>

<llo_original>
// kernel: _graph_layer_forward.1
$region0: #{_graph_layer_forward.1}
  #allocation0 [shape = 'u32[]', space=smem, size = 0x4, offset = 0x4, fixed_abs, tag = 'smem constant byte address 0x4 - core index']
  #allocation1 [shape = 'u32[144,128]{1,0:T(1,128)}', space=vmem, size = 0x12000, scoped, tag = 'internal scratch']
  %s0 = inlined_call_operand.vmem [shape: f32[2,16,128], index: 0, kind: input, shape index: {}]
  %s1 = inlined_call_operand.vmem [shape: f32[1,32,32], index: 1, kind: input, shape index: {}]
  %s2 = inlined_call_operand.vmem [shape: f32[2,16,1], index: 2, kind: input, shape index: {}]
  %s3 = inlined_call_operand.vmem [shape: f32[128,128], index: 3, kind: input, shape index: {}]
  %s4 = inlined_call_operand.vmem [shape: f32[1,128], index: 4, kind: input, shape index: {}]
  %s5 = inlined_call_operand.hbm [shape: f32[256,384], index: 5, kind: input, shape index: {}]
  %s6 = inlined_call_operand.vmem [shape: f32[1,384], index: 6, kind: input, shape index: {}]
  %s7 = inlined_call_operand.vmem [shape: f32[128,128], index: 7, kind: input, shape index: {}]
  %s8 = inlined_call_operand.hbm [shape: f32[2,16,128], index: 8, kind: output, shape index: {}]
  %s9 = sld [smem:[#allocation0]]
  $region46: #{_graph_layer_forward.1} parent=0
    _
  %s11 = ssub.s32 1, %s9
  %s12 = scalar_select 0, %s11, %s9
  $region1: #{_graph_layer_forward.1} parent=0
    #allocation2 [shape = 'u8[393216]{0}', space=vmem, size = 0x60000, scoped, tag = 'input window, operand 5, single buffered']
    #allocation3 [shape = 's32[1]{0}', space=sflag, size = 0x4, scoped, tag = 'scoped memory for _graph_layer_forward.1']
    #allocation4 [shape = 's32[1]{0}', space=sflag, size = 0x4, scoped, tag = 'scoped memory for _graph_layer_forward.1']
    #allocation5 [shape = 'u8[16384]{0}', space=vmem, size = 0x4000, scoped, tag = 'output window, operand 0, single buffered']
    %13 = vsyncpa [#allocation3], 0
    %14 = vsyncpa [#allocation4], 0
    // Predicated region
    $region2: #{_graph_layer_forward.1} parent=1 // pred_check
      _
    $region3: #{_graph_layer_forward.1} parent=1 // pred_check_branch
      %16 = sbr.rel (0) target = $region5
    $region4: #{_graph_layer_forward.1} parent=1 // pred_region
      _
    $region5: #{_graph_layer_forward.1} parent=1 // pred_fallthru
      _
    // Predicated region
    $region6: #{_graph_layer_forward.1} parent=1 // pred_check
      _
    $region7: #{_graph_layer_forward.1} parent=1 // pred_check_branch
      %18 = sbr.rel (0) target = $region9
    $region8: #{_graph_layer_forward.1} parent=1 // pred_region
      _
    $region9: #{_graph_layer_forward.1} parent=1 // pred_fallthru
      _
    // Predicated region
    $region10: #{_graph_layer_forward.1} parent=1 // pred_check
      _
    $region11: #{_graph_layer_forward.1} parent=1 // pred_check_branch
      %20 = sbr.rel (0) target = $region13
    $region12: #{_graph_layer_forward.1} parent=1 // pred_region
      _
    $region13: #{_graph_layer_forward.1} parent=1 // pred_fallthru
      _
    // Predicated region
    $region14: #{_graph_layer_forward.1} parent=1 // pred_check
      _
    $region15: #{_graph_layer_forward.1} parent=1 // pred_check_branch
      %22 = sbr.rel (0) target = $region17
    $region16: #{_graph_layer_forward.1} parent=1 // pred_region
      _
    $region17: #{_graph_layer_forward.1} parent=1 // pred_fallthru
      _
    // Predicated region
    $region18: #{_graph_layer_forward.1} parent=1 // pred_check
      _
    $region19: #{_graph_layer_forward.1} parent=1 // pred_check_branch
      %24 = sbr.rel (0) target = $region21
    $region20: #{_graph_layer_forward.1} parent=1 // pred_region
      _
    $region21: #{_graph_layer_forward.1} parent=1 // pred_fallthru
      _
    // Predicated region
    $region22: #{_graph_layer_forward.1} parent=1 // pred_check
      _
    $region23: #{_graph_layer_forward.1} parent=1 // pred_check_branch
      %26 = sbr.rel (0) target = $region25
    $region24: #{_graph_layer_forward.1} parent=1 // pred_region
      %s28 = ssub.s32 12288, 12288
      %29 = vsyncadd [#allocation3], %s28
      %s30 = sshll.u32 [#allocation2], 4
      %s31 = int_to_ptr.vmem [resolvable:$true] %s30
      %36 = dma.hbm_to_vmem [thread:$0]  %s5, 12288, %s31, [#allocation3], 384, 384, 24
    $region25: #{_graph_layer_forward.1} parent=1 // pred_fallthru
      _
    // Predicated region
    $region26: #{_graph_layer_forward.1} parent=1 // pred_check
      _
    $region27: #{_graph_layer_forward.1} parent=1 // pred_check_branch
      %38 = sbr.rel (0) target = $region29
    $region28: #{_graph_layer_forward.1} parent=1 // pred_region
      _
    $region29: #{_graph_layer_forward.1} parent=1 // pred_fallthru
      _
    // Predicated region
    $region30: #{_graph_layer_forward.1} parent=1 // pred_check
      _
    $region31: #{_graph_layer_forward.1} parent=1 // pred_check_branch
      %40 = sbr.rel (0) target = $region33
    $region32: #{_graph_layer_forward.1} parent=1 // pred_region
      _
    $region33: #{_graph_layer_forward.1} parent=1 // pred_fallthru
      _
    // Predicated region
    $region34: #{_graph_layer_forward.1} parent=1 // pred_check
      _
    $region35: #{_graph_layer_forward.1} parent=1 // pred_check_branch
      %42 = sbr.rel (0) target = $region37
    $region36: #{_graph_layer_forward.1} parent=1 // pred_region
      %43 = dma.done [#allocation3], 12288
    $region37: #{_graph_layer_forward.1} parent=1 // pred_fallthru
      _
    %v44 = vld [vmem:[%s2] sm:$0xff]
    %v45 = vld [vmem:[%s2 + $0x8] sm:$0xff]
    %v46 = vld [vmem:[%s2 + $0x10] sm:$0xff]
    %v47 = vld [vmem:[%s2 + $0x18] sm:$0xff]
    %49 = vset.pattern.permute.xlu0 0
    %50 = vperm.xlu0 %49, %v44
    %v51 = vpop.permute.xlu0 %50
    %54 = vset.pattern.permute.xlu0 0
    %55 = vperm.xlu0 %54, %v45
    %v56 = vpop.permute.xlu0 %55
    %59 = vset.pattern.permute.xlu0 0
    %60 = vperm.xlu0 %59, %v46
    %v61 = vpop.permute.xlu0 %60
    %64 = vset.pattern.permute.xlu0 0
    %65 = vperm.xlu0 %64, %v47
    %v66 = vpop.permute.xlu0 %65
    %v68 = vld [vmem:[%s0] sm:$0xff]
    %v69 = vld [vmem:[%s0 + $0x8] sm:$0xff]
    %v70 = vld [vmem:[%s0 + $0x10] sm:$0xff]
    %v71 = vld [vmem:[%s0 + $0x18] sm:$0xff]
    %v72 = vld [vmem:[%s3] sm:$0xff]
    %v73 = vld [vmem:[%s3 + $0x8] sm:$0xff]
    %v74 = vld [vmem:[%s3 + $0x10] sm:$0xff]
    %v75 = vld [vmem:[%s3 + $0x18] sm:$0xff]
    %v76 = vld [vmem:[%s3 + $0x20] sm:$0xff]
    %v77 = vld [vmem:[%s3 + $0x28] sm:$0xff]
    %v78 = vld [vmem:[%s3 + $0x30] sm:$0xff]
    %v79 = vld [vmem:[%s3 + $0x38] sm:$0xff]
    %v80 = vld [vmem:[%s3 + $0x40] sm:$0xff]
    %v81 = vld [vmem:[%s3 + $0x48] sm:$0xff]
    %v82 = vld [vmem:[%s3 + $0x50] sm:$0xff]
    %v83 = vld [vmem:[%s3 + $0x58] sm:$0xff]
    %v84 = vld [vmem:[%s3 + $0x60] sm:$0xff]
    %v85 = vld [vmem:[%s3 + $0x68] sm:$0xff]
    %v86 = vld [vmem:[%s3 + $0x70] sm:$0xff]
    %v87 = vld [vmem:[%s3 + $0x78] sm:$0xff]
    %v88 = vld [vmem:[%s4] sm:$0x1]
    %v90 = vlaneseq
    %v91 = vshrl.u32 %v90, 7
    %v92 = vsub.s32 0, %v91
    %v93 = vrot.slane %v88, %v92
    %95 = vmatprep.subr.mxu0 0.0
    %96 = vmatpush1.msra.mxu0 %v72
    %97 = vmatprep.subr.mxu0 0.0
    %98 = vmatpush1.msra.mxu0 %v73
    %99 = vmatprep.subr.mxu0 0.0
    %100 = vmatpush1.msra.mxu0 %v74
    %101 = vmatprep.subr.mxu0 0.0
    %102 = vmatpush1.msra.mxu0 %v75
    %103 = vmatprep.subr.mxu0 0.0
    %104 = vmatpush1.msra.mxu0 %v76
    %105 = vmatprep.subr.mxu0 0.0
    %106 = vmatpush1.msra.mxu0 %v77
    %107 = vmatprep.subr.mxu0 0.0
    %108 = vmatpush1.msra.mxu0 %v78
    %109 = vmatprep.subr.mxu0 0.0
    %110 = vmatpush1.msra.mxu0 %v79
    %111 = vmatprep.subr.mxu0 0.0
    %112 = vmatpush1.msra.mxu0 %v80
    %113 = vmatprep.subr.mxu0 0.0
    %114 = vmatpush1.msra.mxu0 %v81
    %115 = vmatprep.subr.mxu0 0.0
    %116 = vmatpush1.msra.mxu0 %v82
    %117 = vmatprep.subr.mxu0 0.0
    %118 = vmatpush1.msra.mxu0 %v83
    %119 = vmatprep.subr.mxu0 0.0
    %120 = vmatpush1.msra.mxu0 %v84
    %121 = vmatprep.subr.mxu0 0.0
    %122 = vmatpush1.msra.mxu0 %v85
    %123 = vmatprep.subr.mxu0 0.0
    %124 = vmatpush1.msra.mxu0 %v86
    %125 = vmatprep.subr.mxu0 0.0
    %126 = vmatpush1.msra.mxu0 %v87
    %127 = vmatprep.subr.mxu0 0.0
    %128 = vmatpush1.msra.mxu0 0.0
    %129 = vmatprep.subr.mxu0 0.0
    %130 = vmatpush1.msra.mxu0 0.0
    %131 = vmatprep.subr.mxu0 0.0
    %132 = vmatpush1.msra.mxu0 0.0
    %133 = vmatprep.subr.mxu0 0.0
    %134 = vmatpush1.msra.mxu0 0.0
    %135 = vmatprep.subr.mxu0 0.0
    %136 = vmatpush1.msra.mxu0 0.0
    %137 = vmatprep.subr.mxu0 0.0
    %138 = vmatpush1.msra.mxu0 0.0
    %139 = vmatprep.subr.mxu0 0.0
    %140 = vmatpush1.msra.mxu0 0.0
    %141 = vmatprep.subr.mxu0 0.0
    %142 = vmatpush1.msra.mxu0 0.0
    %143 = vmatprep.subr.mxu0 0.0
    %144 = vmatpush1.msra.mxu0 0.0
    %145 = vmatprep.subr.mxu0 0.0
    %146 = vmatpush1.msra.mxu0 0.0
    %147 = vmatprep.subr.mxu0 0.0
    %148 = vmatpush1.msra.mxu0 0.0
    %149 = vmatprep.subr.mxu0 0.0
    %150 = vmatpush1.msra.mxu0 0.0
    %151 = vmatprep.subr.mxu0 0.0
    %152 = vmatpush1.msra.mxu0 0.0
    %153 = vmatprep.subr.mxu0 0.0
    %154 = vmatpush1.msra.mxu0 0.0
    %155 = vmatprep.subr.mxu0 0.0
    %156 = vmatpush1.msra.mxu0 0.0
    %157 = vmatprep.subr.mxu0 0.0
    %158 = vmatpush1.msra.mxu0 0.0
    %159 = vmatprep.mubr.f32.mxu0 0.0
    %160 = vmatmul.mubr.f32.gmra.mrb[0].mxu0 %v68
    %v161 = vpop.f32.mrb[0].mxu0
    %v162 = vadd.f32 %v93, %v161
    %v163 = vpop.f32.mrb[0].mxu0
    %164 = vmatprep.mubr.f32.mxu0 0.0
    %165 = vmatmul.mubr.f32.gmra.mrb[0].mxu0 %v69
    %v166 = vpop.f32.mrb[0].mxu0
    %v167 = vadd.f32 %v93, %v166
    %v168 = vpop.f32.mrb[0].mxu0
    %169 = vmatprep.mubr.f32.mxu0 0.0
    %170 = vmatmul.mubr.f32.gmra.mrb[0].mxu0 %v70
    %v171 = vpop.f32.mrb[0].mxu0
    %v172 = vadd.f32 %v93, %v171
    %v173 = vpop.f32.mrb[0].mxu0
    %174 = vmatprep.mubr.f32.mxu0 0.0
    %175 = vmatmul.mubr.f32.gmra.mrb[0].mxu0 %v71
    %v176 = vpop.f32.mrb[0].mxu0
    %v177 = vadd.f32 %v93, %v176
    %v178 = vpop.f32.mrb[0].mxu0
    %179 = vdwg.mxu0
    %v180 = vtanh.pop %v162
    %v181 = vtanh.pop %v167
    %v182 = vtanh.pop %v172
    %v183 = vtanh.pop %v177
    %v184 = vmul.f32 %v51, %v180
    %v185 = vmul.f32 %v56, %v181
    %v186 = vmul.f32 %v61, %v182
    %v187 = vmul.f32 %v66, %v183
    %v188 = vld [vmem:[%s1] sm:$0xff]
    %v189 = vld [vmem:[%s1 + $0x8] sm:$0xff]
    %v190 = vld [vmem:[%s1 + $0x10] sm:$0xff]
    %v191 = vld [vmem:[%s1 + $0x18] sm:$0xff]
    %v192 = vld [vmem:[%s6] sm:$0x7]
    %vm193 = vcmask 261120
    %v195 = vsel %vm193, %v188, 0
    %v198 = vsel %vm193, %v189, 0
    %v201 = vsel %vm193, %v190, 0
    %v204 = vsel %vm193, %v191, 0
    %206 = vmatprep.subr.mxu0 0.0
    %207 = vmatpush1.msra.mxu0 %v184
    %208 = vmatprep.subr.mxu0 0.0
    %209 = vmatpush1.msra.mxu0 %v185
    %210 = vmatprep.subr.mxu0 0.0
    %211 = vmatpush1.msra.mxu0 %v186
    %212 = vmatprep.subr.mxu0 0.0
    %213 = vmatpush1.msra.mxu0 %v187
    %214 = vmatprep.subr.mxu0 0.0
    %215 = vmatpush1.msra.mxu0 0.0
    %216 = vmatprep.subr.mxu0 0.0
    %217 = vmatpush1.msra.mxu0 0.0
    %218 = vmatprep.subr.mxu0 0.0
    %219 = vmatpush1.msra.mxu0 0.0
    %220 = vmatprep.subr.mxu0 0.0
    %221 = vmatpush1.msra.mxu0 0.0
    %222 = vmatprep.subr.mxu0 0.0
    %223 = vmatpush1.msra.mxu0 0.0
    %224 = vmatprep.subr.mxu0 0.0
    %225 = vmatpush1.msra.mxu0 0.0
    %226 = vmatprep.subr.mxu0 0.0
    %227 = vmatpush1.msra.mxu0 0.0
    %228 = vmatprep.subr.mxu0 0.0
    %229 = vmatpush1.msra.mxu0 0.0
    %230 = vmatprep.subr.mxu0 0.0
    %231 = vmatpush1.msra.mxu0 0.0
    %232 = vmatprep.subr.mxu0 0.0
    %233 = vmatpush1.msra.mxu0 0.0
    %234 = vmatprep.subr.mxu0 0.0
    %235 = vmatpush1.msra.mxu0 0.0
    %236 = vmatprep.subr.mxu0 0.0
    %237 = vmatpush1.msra.mxu0 0.0
    %238 = vmatprep.subr.mxu0 0.0
    %239 = vmatpush1.msra.mxu0 0.0
    %240 = vmatprep.subr.mxu0 0.0
    %241 = vmatpush1.msra.mxu0 0.0
    %242 = vmatprep.subr.mxu0 0.0
    %243 = vmatpush1.msra.mxu0 0.0
    %244 = vmatprep.subr.mxu0 0.0
    %245 = vmatpush1.msra.mxu0 0.0
    %246 = vmatprep.subr.mxu0 0.0
    %247 = vmatpush1.msra.mxu0 0.0
    %248 = vmatprep.subr.mxu0 0.0
    %249 = vmatpush1.msra.mxu0 0.0
    %250 = vmatprep.subr.mxu0 0.0
    %251 = vmatpush1.msra.mxu0 0.0
    %252 = vmatprep.subr.mxu0 0.0
    %253 = vmatpush1.msra.mxu0 0.0
    %254 = vmatprep.subr.mxu0 0.0
    %255 = vmatpush1.msra.mxu0 0.0
    %256 = vmatprep.subr.mxu0 0.0
    %257 = vmatpush1.msra.mxu0 0.0
    %258 = vmatprep.subr.mxu0 0.0
    %259 = vmatpush1.msra.mxu0 0.0
    %260 = vmatprep.subr.mxu0 0.0
    %261 = vmatpush1.msra.mxu0 0.0
    %262 = vmatprep.subr.mxu0 0.0
    %263 = vmatpush1.msra.mxu0 0.0
    %264 = vmatprep.subr.mxu0 0.0
    %265 = vmatpush1.msra.mxu0 0.0
    %266 = vmatprep.subr.mxu0 0.0
    %267 = vmatpush1.msra.mxu0 0.0
    %268 = vmatprep.subr.mxu0 0.0
    %269 = vmatpush1.msra.mxu0 0.0
    %270 = vmatprep.mubr.f32.mxu0 0.0
    %271 = vmatmul.mubr.f32.gmra.mrb[0].mxu0 %v195
    %v272 = vpop.f32.mrb[0].mxu0
    %v273 = vadd.f32 0.0, %v272
    %v274 = vpop.f32.mrb[0].mxu0
    %275 = vmatprep.mubr.f32.mxu0 0.0
    %276 = vmatmul.mubr.f32.gmra.mrb[0].mxu0 %v198
    %v277 = vpop.f32.mrb[0].mxu0
    %v278 = vadd.f32 0.0, %v277
    %v279 = vpop.f32.mrb[0].mxu0
    %280 = vmatprep.mubr.f32.mxu0 0.0
    %281 = vmatmul.mubr.f32.gmra.mrb[0].mxu0 %v201
    %v282 = vpop.f32.mrb[0].mxu0
    %v283 = vadd.f32 0.0, %v282
    %v284 = vpop.f32.mrb[0].mxu0
    %285 = vmatprep.mubr.f32.mxu0 0.0
    %286 = vmatmul.mubr.f32.gmra.mrb[0].mxu0 %v204
    %v287 = vpop.f32.mrb[0].mxu0
    %v288 = vadd.f32 0.0, %v287
    %v289 = vpop.f32.mrb[0].mxu0
    %290 = vdwg.mxu0
    %v291 = vld [vmem:[#allocation2] sm:$0xff]
    %v292 = vld [vmem:[#allocation2 + $0x8] sm:$0xff]
    %v293 = vld [vmem:[#allocation2 + $0x10] sm:$0xff]
    %v294 = vld [vmem:[#allocation2 + $0x18] sm:$0xff]
    %v295 = vld [vmem:[#allocation2 + $0x20] sm:$0xff]
    %v296 = vld [vmem:[#allocation2 + $0x28] sm:$0xff]
    %v297 = vld [vmem:[#allocation2 + $0x30] sm:$0xff]
    %v298 = vld [vmem:[#allocation2 + $0x38] sm:$0xff]
    %v299 = vld [vmem:[#allocation2 + $0x40] sm:$0xff]
    %v300 = vld [vmem:[#allocation2 + $0x48] sm:$0xff]
    %v301 = vld [vmem:[#allocation2 + $0x50] sm:$0xff]
    %v302 = vld [vmem:[#allocation2 + $0x58] sm:$0xff]
    %v303 = vld [vmem:[#allocation2 + $0x60] sm:$0xff]
    %v304 = vld [vmem:[#allocation2 + $0x68] sm:$0xff]
    %v305 = vld [vmem:[#allocation2 + $0x70] sm:$0xff]
    %v306 = vld [vmem:[#allocation2 + $0x78] sm:$0xff]
    %v307 = vld [vmem:[#allocation2 + $0x80] sm:$0xff]
    %v308 = vld [vmem:[#allocation2 + $0x88] sm:$0xff]
    %v309 = vld [vmem:[#allocation2 + $0x90] sm:$0xff]
    %v310 = vld [vmem:[#allocation2 + $0x98] sm:$0xff]
    %v311 = vld [vmem:[#allocation2 + $0xa0] sm:$0xff]
    %v312 = vld [vmem:[#allocation2 + $0xa8] sm:$0xff]
    %v313 = vld [vmem:[#allocation2 + $0xb0] sm:$0xff]
    %v314 = vld [vmem:[#allocation2 + $0xb8] sm:$0xff]
    %v315 = vld [vmem:[#allocation2 + $0xc0] sm:$0xff]
    %v316 = vld [vmem:[#allocation2 + $0xc8] sm:$0xff]
    %v317 = vld [vmem:[#allocation2 + $0xd0] sm:$0xff]
    %v318 = vld [vmem:[#allocation2 + $0xd8] sm:$0xff]
    %v319 = vld [vmem:[#allocation2 + $0xe0] sm:$0xff]
    %v320 = vld [vmem:[#allocation2 + $0xe8] sm:$0xff]
    %v321 = vld [vmem:[#allocation2 + $0xf0] sm:$0xff]
    %v322 = vld [vmem:[#allocation2 + $0xf8] sm:$0xff]
    %v323 = vld [vmem:[#allocation2 + $0x100] sm:$0xff]
    %v324 = vld [vmem:[#allocation2 + $0x108] sm:$0xff]
    %v325 = vld [vmem:[#allocation2 + $0x110] sm:$0xff]
    %v326 = vld [vmem:[#allocation2 + $0x118] sm:$0xff]
    %v327 = vld [vmem:[#allocation2 + $0x120] sm:$0xff]
    %v328 = vld [vmem:[#allocation2 + $0x128] sm:$0xff]
    %v329 = vld [vmem:[#allocation2 + $0x130] sm:$0xff]
    %v330 = vld [vmem:[#allocation2 + $0x138] sm:$0xff]
    %v331 = vld [vmem:[#allocation2 + $0x140] sm:$0xff]
    %v332 = vld [vmem:[#allocation2 + $0x148] sm:$0xff]
    %v333 = vld [vmem:[#allocation2 + $0x150] sm:$0xff]
    %v334 = vld [vmem:[#allocation2 + $0x158] sm:$0xff]
    %v335 = vld [vmem:[#allocation2 + $0x160] sm:$0xff]
    %v336 = vld [vmem:[#allocation2 + $0x168] sm:$0xff]
    %v337 = vld [vmem:[#allocation2 + $0x170] sm:$0xff]
    %v338 = vld [vmem:[#allocation2 + $0x178] sm:$0xff]
    %v339 = vld [vmem:[#allocation2 + $0x180] sm:$0xff]
    %v340 = vld [vmem:[#allocation2 + $0x188] sm:$0xff]
    %v341 = vld [vmem:[#allocation2 + $0x190] sm:$0xff]
    %v342 = vld [vmem:[#allocation2 + $0x198] sm:$0xff]
    %v343 = vld [vmem:[#allocation2 + $0x1a0] sm:$0xff]
    %v344 = vld [vmem:[#allocation2 + $0x1a8] sm:$0xff]
    %v345 = vld [vmem:[#allocation2 + $0x1b0] sm:$0xff]
    %v346 = vld [vmem:[#allocation2 + $0x1b8] sm:$0xff]
    %v347 = vld [vmem:[#allocation2 + $0x1c0] sm:$0xff]
    %v348 = vld [vmem:[#allocation2 + $0x1c8] sm:$0xff]
    %v349 = vld [vmem:[#allocation2 + $0x1d0] sm:$0xff]
    %v350 = vld [vmem:[#allocation2 + $0x1d8] sm:$0xff]
    %v351 = vld [vmem:[#allocation2 + $0x1e0] sm:$0xff]
    %v352 = vld [vmem:[#allocation2 + $0x1e8] sm:$0xff]
    %v353 = vld [vmem:[#allocation2 + $0x1f0] sm:$0xff]
    %v354 = vld [vmem:[#allocation2 + $0x1f8] sm:$0xff]
    %v355 = vld [vmem:[#allocation2 + $0x200] sm:$0xff]
    %v356 = vld [vmem:[#allocation2 + $0x208] sm:$0xff]
    %v357 = vld [vmem:[#allocation2 + $0x210] sm:$0xff]
    %v358 = vld [vmem:[#allocation2 + $0x218] sm:$0xff]
    %v359 = vld [vmem:[#allocation2 + $0x220] sm:$0xff]
    %v360 = vld [vmem:[#allocation2 + $0x228] sm:$0xff]
    %v361 = vld [vmem:[#allocation2 + $0x230] sm:$0xff]
    %v362 = vld [vmem:[#allocation2 + $0x238] sm:$0xff]
    %v363 = vld [vmem:[#allocation2 + $0x240] sm:$0xff]
    %v364 = vld [vmem:[#allocation2 + $0x248] sm:$0xff]
    %v365 = vld [vmem:[#allocation2 + $0x250] sm:$0xff]
    %v366 = vld [vmem:[#allocation2 + $0x258] sm:$0xff]
    %v367 = vld [vmem:[#allocation2 + $0x260] sm:$0xff]
    %v368 = vld [vmem:[#allocation2 + $0x268] sm:$0xff]
    %v369 = vld [vmem:[#allocation2 + $0x270] sm:$0xff]
    %v370 = vld [vmem:[#allocation2 + $0x278] sm:$0xff]
    %v371 = vld [vmem:[#allocation2 + $0x280] sm:$0xff]
    %v372 = vld [vmem:[#allocation2 + $0x288] sm:$0xff]
    %v373 = vld [vmem:[#allocation2 + $0x290] sm:$0xff]
    %v374 = vld [vmem:[#allocation2 + $0x298] sm:$0xff]
    %v375 = vld [vmem:[#allocation2 + $0x2a0] sm:$0xff]
    %v376 = vld [vmem:[#allocation2 + $0x2a8] sm:$0xff]
    %v377 = vld [vmem:[#allocation2 + $0x2b0] sm:$0xff]
    %v378 = vld [vmem:[#allocation2 + $0x2b8] sm:$0xff]
    %v379 = vld [vmem:[#allocation2 + $0x2c0] sm:$0xff]
    %v380 = vld [vmem:[#allocation2 + $0x2c8] sm:$0xff]
    %v381 = vld [vmem:[#allocation2 + $0x2d0] sm:$0xff]
    %v382 = vld [vmem:[#allocation2 + $0x2d8] sm:$0xff]
    %v383 = vld [vmem:[#allocation2 + $0x2e0] sm:$0xff]
    %v384 = vld [vmem:[#allocation2 + $0x2e8] sm:$0xff]
    %v385 = vld [vmem:[#allocation2 + $0x2f0] sm:$0xff]
    %v386 = vld [vmem:[#allocation2 + $0x2f8] sm:$0xff]
    %v388 = vlaneseq
    %v389 = vshrl.u32 %v388, 7
    %v390 = vsub.s32 0, %v389
    %v391 = vrot.slane %v192, %v390
    %v392 = vlaneseq
    %v393 = vshrl.u32 %v392, 7
    %v394 = vsub.s32 1, %v393
    %v395 = vrot.slane %v192, %v394
    %v396 = vlaneseq
    %v397 = vshrl.u32 %v396, 7
    %v398 = vsub.s32 2, %v397
    %v399 = vrot.slane %v192, %v398
    %403 = vmatprep.subr.mxu0 %v292
    %404 = vmatpush1.msra.mxu0 %v291
    %405 = vmatprep.subr.mxu0 %v295
    %406 = vmatpush1.msra.mxu0 %v294
    %407 = vmatprep.subr.mxu0 %v298
    %408 = vmatpush1.msra.mxu0 %v297
    %409 = vmatprep.subr.mxu0 %v301
    %410 = vmatpush1.msra.mxu0 %v300
    %411 = vmatprep.subr.mxu0 %v304
    %412 = vmatpush1.msra.mxu0 %v303
    %413 = vmatprep.subr.mxu0 %v307
    %414 = vmatpush1.msra.mxu0 %v306
    %415 = vmatprep.subr.mxu0 %v310
    %416 = vmatpush1.msra.mxu0 %v309
    %417 = vmatprep.subr.mxu0 %v313
    %418 = vmatpush1.msra.mxu0 %v312
    %419 = vmatprep.subr.mxu0 %v316
    %420 = vmatpush1.msra.mxu0 %v315
    %421 = vmatprep.subr.mxu0 %v319
    %422 = vmatpush1.msra.mxu0 %v318
    %423 = vmatprep.subr.mxu0 %v322
    %424 = vmatpush1.msra.mxu0 %v321
    %425 = vmatprep.subr.mxu0 %v325
    %426 = vmatpush1.msra.mxu0 %v324
    %427 = vmatprep.subr.mxu0 %v328
    %428 = vmatpush1.msra.mxu0 %v327
    %429 = vmatprep.subr.mxu0 %v331
    %430 = vmatpush1.msra.mxu0 %v330
    %431 = vmatprep.subr.mxu0 %v334
    %432 = vmatpush1.msra.mxu0 %v333
    %433 = vmatprep.subr.mxu0 %v337
    %434 = vmatpush1.msra.mxu0 %v336
    %435 = vmatprep.subr.mxu0 %v340
    %436 = vmatpush1.msra.mxu0 %v339
    %437 = vmatprep.subr.mxu0 %v343
    %438 = vmatpush1.msra.mxu0 %v342
    %439 = vmatprep.subr.mxu0 %v346
    %440 = vmatpush1.msra.mxu0 %v345
    %441 = vmatprep.subr.mxu0 %v349
    %442 = vmatpush1.msra.mxu0 %v348
    %443 = vmatprep.subr.mxu0 %v352
    %444 = vmatpush1.msra.mxu0 %v351
    %445 = vmatprep.subr.mxu0 %v355
    %446 = vmatpush1.msra.mxu0 %v354
    %447 = vmatprep.subr.mxu0 %v358
    %448 = vmatpush1.msra.mxu0 %v357
    %449 = vmatprep.subr.mxu0 %v361
    %450 = vmatpush1.msra.mxu0 %v360
    %451 = vmatprep.subr.mxu0 %v364
    %452 = vmatpush1.msra.mxu0 %v363
    %453 = vmatprep.subr.mxu0 %v367
    %454 = vmatpush1.msra.mxu0 %v366
    %455 = vmatprep.subr.mxu0 %v370
    %456 = vmatpush1.msra.mxu0 %v369
    %457 = vmatprep.subr.mxu0 %v373
    %458 = vmatpush1.msra.mxu0 %v372
    %459 = vmatprep.subr.mxu0 %v376
    %460 = vmatpush1.msra.mxu0 %v375
    %461 = vmatprep.subr.mxu0 %v379
    %462 = vmatpush1.msra.mxu0 %v378
    %463 = vmatprep.subr.mxu0 %v382
    %464 = vmatpush1.msra.mxu0 %v381
    %465 = vmatprep.subr.mxu0 %v385
    %466 = vmatpush1.msra.mxu0 %v384
    %467 = vmatprep.mubr.f32.mxu0 %v184
    %468 = vmatmul.mubr.f32.gmra.mrb[0].mxu0 %v273
    %v469 = vpop.f32.mrb[0].mxu0
    %v470 = vadd.f32 %v391, %v469
    %v471 = vpop.f32.mrb[0].mxu0
    %v472 = vadd.f32 %v395, %v471
    %473 = vmatprep.mubr.f32.mxu0 %v185
    %474 = vmatmul.mubr.f32.gmra.mrb[0].mxu0 %v278
    %v475 = vpop.f32.mrb[0].mxu0
    %v476 = vadd.f32 %v391, %v475
    %v477 = vpop.f32.mrb[0].mxu0
    %v478 = vadd.f32 %v395, %v477
    %479 = vmatprep.mubr.f32.mxu0 %v186
    %480 = vmatmul.mubr.f32.gmra.mrb[0].mxu0 %v283
    %v481 = vpop.f32.mrb[0].mxu0
    %v482 = vadd.f32 %v391, %v481
    %v483 = vpop.f32.mrb[0].mxu0
    %v484 = vadd.f32 %v395, %v483
    %485 = vmatprep.mubr.f32.mxu0 %v187
    %486 = vmatmul.mubr.f32.gmra.mrb[0].mxu0 %v288
    %v487 = vpop.f32.mrb[0].mxu0
    %v488 = vadd.f32 %v391, %v487
    %v489 = vpop.f32.mrb[0].mxu0
    %v490 = vadd.f32 %v395, %v489
    %491 = vdwg.mxu0
    %492 = vmatprep.subr.mxu0 0.0
    %493 = vmatpush1.msra.mxu0 %v293
    %494 = vmatprep.subr.mxu0 0.0
    %495 = vmatpush1.msra.mxu0 %v296
    %496 = vmatprep.subr.mxu0 0.0
    %497 = vmatpush1.msra.mxu0 %v299
    %498 = vmatprep.subr.mxu0 0.0
    %499 = vmatpush1.msra.mxu0 %v302
    %500 = vmatprep.subr.mxu0 0.0
    %501 = vmatpush1.msra.mxu0 %v305
    %502 = vmatprep.subr.mxu0 0.0
    %503 = vmatpush1.msra.mxu0 %v308
    %504 = vmatprep.subr.mxu0 0.0
    %505 = vmatpush1.msra.mxu0 %v311
    %506 = vmatprep.subr.mxu0 0.0
    %507 = vmatpush1.msra.mxu0 %v314
    %508 = vmatprep.subr.mxu0 0.0
    %509 = vmatpush1.msra.mxu0 %v317
    %510 = vmatprep.subr.mxu0 0.0
    %511 = vmatpush1.msra.mxu0 %v320
    %512 = vmatprep.subr.mxu0 0.0
    %513 = vmatpush1.msra.mxu0 %v323
    %514 = vmatprep.subr.mxu0 0.0
    %515 = vmatpush1.msra.mxu0 %v326
    %516 = vmatprep.subr.mxu0 0.0
    %517 = vmatpush1.msra.mxu0 %v329
    %518 = vmatprep.subr.mxu0 0.0
    %519 = vmatpush1.msra.mxu0 %v332
    %520 = vmatprep.subr.mxu0 0.0
    %521 = vmatpush1.msra.mxu0 %v335
    %522 = vmatprep.subr.mxu0 0.0
    %523 = vmatpush1.msra.mxu0 %v338
    %524 = vmatprep.subr.mxu0 0.0
    %525 = vmatpush1.msra.mxu0 %v341
    %526 = vmatprep.subr.mxu0 0.0
    %527 = vmatpush1.msra.mxu0 %v344
    %528 = vmatprep.subr.mxu0 0.0
    %529 = vmatpush1.msra.mxu0 %v347
    %530 = vmatprep.subr.mxu0 0.0
    %531 = vmatpush1.msra.mxu0 %v350
    %532 = vmatprep.subr.mxu0 0.0
    %533 = vmatpush1.msra.mxu0 %v353
    %534 = vmatprep.subr.mxu0 0.0
    %535 = vmatpush1.msra.mxu0 %v356
    %536 = vmatprep.subr.mxu0 0.0
    %537 = vmatpush1.msra.mxu0 %v359
    %538 = vmatprep.subr.mxu0 0.0
    %539 = vmatpush1.msra.mxu0 %v362
    %540 = vmatprep.subr.mxu0 0.0
    %541 = vmatpush1.msra.mxu0 %v365
    %542 = vmatprep.subr.mxu0 0.0
    %543 = vmatpush1.msra.mxu0 %v368
    %544 = vmatprep.subr.mxu0 0.0
    %545 = vmatpush1.msra.mxu0 %v371
    %546 = vmatprep.subr.mxu0 0.0
    %547 = vmatpush1.msra.mxu0 %v374
    %548 = vmatprep.subr.mxu0 0.0
    %549 = vmatpush1.msra.mxu0 %v377
    %550 = vmatprep.subr.mxu0 0.0
    %551 = vmatpush1.msra.mxu0 %v380
    %552 = vmatprep.subr.mxu0 0.0
    %553 = vmatpush1.msra.mxu0 %v383
    %554 = vmatprep.subr.mxu0 0.0
    %555 = vmatpush1.msra.mxu0 %v386
    %556 = vmatprep.mubr.f32.mxu0 %v184
    %557 = vmatmul.mubr.f32.gmra.mrb[0].mxu0 %v273
    %v558 = vpop.f32.mrb[0].mxu0
    %v559 = vadd.f32 %v399, %v558
    %v560 = vpop.f32.mrb[0].mxu0
    %561 = vmatprep.mubr.f32.mxu0 %v185
    %562 = vmatmul.mubr.f32.gmra.mrb[0].mxu0 %v278
    %v563 = vpop.f32.mrb[0].mxu0
    %v564 = vadd.f32 %v399, %v563
    %v565 = vpop.f32.mrb[0].mxu0
    %566 = vmatprep.mubr.f32.mxu0 %v186
    %567 = vmatmul.mubr.f32.gmra.mrb[0].mxu0 %v283
    %v568 = vpop.f32.mrb[0].mxu0
    %v569 = vadd.f32 %v399, %v568
    %v570 = vpop.f32.mrb[0].mxu0
    %571 = vmatprep.mubr.f32.mxu0 %v187
    %572 = vmatmul.mubr.f32.gmra.mrb[0].mxu0 %v288
    %v573 = vpop.f32.mrb[0].mxu0
    %v574 = vadd.f32 %v399, %v573
    %v575 = vpop.f32.mrb[0].mxu0
    %576 = vdwg.mxu0
    %v577 = vmul.f32 %v472, 0.5
    %v578 = vmul.f32 %v478, 0.5
    %v579 = vmul.f32 %v484, 0.5
    %v580 = vmul.f32 %v490, 0.5
    %v581 = vtanh.pop %v577
    %v582 = vtanh.pop %v578
    %v583 = vtanh.pop %v579
    %v584 = vtanh.pop %v580
    %v585 = vadd.f32 %v581, 1.0
    %v586 = vadd.f32 %v582, 1.0
    %v587 = vadd.f32 %v583, 1.0
    %v588 = vadd.f32 %v584, 1.0
    %v589 = vmul.f32 %v585, 0.5
    %v590 = vmul.f32 %v586, 0.5
    %v591 = vmul.f32 %v587, 0.5
    %v592 = vmul.f32 %v588, 0.5
    %v593 = vmul.f32 %v589, %v184
    %v594 = vmul.f32 %v590, %v185
    %v595 = vmul.f32 %v591, %v186
    %v596 = vmul.f32 %v592, %v187
    %v597 = vld [vmem:[%s7] sm:$0xff]
    %v598 = vld [vmem:[%s7 + $0x8] sm:$0xff]
    %v599 = vld [vmem:[%s7 + $0x10] sm:$0xff]
    %v600 = vld [vmem:[%s7 + $0x18] sm:$0xff]
    %v601 = vld [vmem:[%s7 + $0x20] sm:$0xff]
    %v602 = vld [vmem:[%s7 + $0x28] sm:$0xff]
    %v603 = vld [vmem:[%s7 + $0x30] sm:$0xff]
    %v604 = vld [vmem:[%s7 + $0x38] sm:$0xff]
    %v605 = vld [vmem:[%s7 + $0x40] sm:$0xff]
    %v606 = vld [vmem:[%s7 + $0x48] sm:$0xff]
    %v607 = vld [vmem:[%s7 + $0x50] sm:$0xff]
    %v608 = vld [vmem:[%s7 + $0x58] sm:$0xff]
    %v609 = vld [vmem:[%s7 + $0x60] sm:$0xff]
    %v610 = vld [vmem:[%s7 + $0x68] sm:$0xff]
    %v611 = vld [vmem:[%s7 + $0x70] sm:$0xff]
    %v612 = vld [vmem:[%s7 + $0x78] sm:$0xff]
    %613 = vmatprep.subr.mxu0 0.0
    %614 = vmatpush1.msra.mxu0 %v597
    %615 = vmatprep.subr.mxu0 0.0
    %616 = vmatpush1.msra.mxu0 %v598
    %617 = vmatprep.subr.mxu0 0.0
    %618 = vmatpush1.msra.mxu0 %v599
    %619 = vmatprep.subr.mxu0 0.0
    %620 = vmatpush1.msra.mxu0 %v600
    %621 = vmatprep.subr.mxu0 0.0
    %622 = vmatpush1.msra.mxu0 %v601
    %623 = vmatprep.subr.mxu0 0.0
    %624 = vmatpush1.msra.mxu0 %v602
    %625 = vmatprep.subr.mxu0 0.0
    %626 = vmatpush1.msra.mxu0 %v603
    %627 = vmatprep.subr.mxu0 0.0
    %628 = vmatpush1.msra.mxu0 %v604
    %629 = vmatprep.subr.mxu0 0.0
    %630 = vmatpush1.msra.mxu0 %v605
    %631 = vmatprep.subr.mxu0 0.0
    %632 = vmatpush1.msra.mxu0 %v606
    %633 = vmatprep.subr.mxu0 0.0
    %634 = vmatpush1.msra.mxu0 %v607
    %635 = vmatprep.subr.mxu0 0.0
    %636 = vmatpush1.msra.mxu0 %v608
    %637 = vmatprep.subr.mxu0 0.0
    %638 = vmatpush1.msra.mxu0 %v609
    %639 = vmatprep.subr.mxu0 0.0
    %640 = vmatpush1.msra.mxu0 %v610
    %641 = vmatprep.subr.mxu0 0.0
    %642 = vmatpush1.msra.mxu0 %v611
    %643 = vmatprep.subr.mxu0 0.0
    %644 = vmatpush1.msra.mxu0 %v612
    %645 = vmatprep.subr.mxu0 0.0
    %646 = vmatpush1.msra.mxu0 0.0
    %647 = vmatprep.subr.mxu0 0.0
    %648 = vmatpush1.msra.mxu0 0.0
    %649 = vmatprep.subr.mxu0 0.0
    %650 = vmatpush1.msra.mxu0 0.0
    %651 = vmatprep.subr.mxu0 0.0
    %652 = vmatpush1.msra.mxu0 0.0
    %653 = vmatprep.subr.mxu0 0.0
    %654 = vmatpush1.msra.mxu0 0.0
    %655 = vmatprep.subr.mxu0 0.0
    %656 = vmatpush1.msra.mxu0 0.0
    %657 = vmatprep.subr.mxu0 0.0
    %658 = vmatpush1.msra.mxu0 0.0
    %659 = vmatprep.subr.mxu0 0.0
    %660 = vmatpush1.msra.mxu0 0.0
    %661 = vmatprep.subr.mxu0 0.0
    %662 = vmatpush1.msra.mxu0 0.0
    %663 = vmatprep.subr.mxu0 0.0
    %664 = vmatpush1.msra.mxu0 0.0
    %665 = vmatprep.subr.mxu0 0.0
    %666 = vmatpush1.msra.mxu0 0.0
    %667 = vmatprep.subr.mxu0 0.0
    %668 = vmatpush1.msra.mxu0 0.0
    %669 = vmatprep.subr.mxu0 0.0
    %670 = vmatpush1.msra.mxu0 0.0
    %671 = vmatprep.subr.mxu0 0.0
    %672 = vmatpush1.msra.mxu0 0.0
    %673 = vmatprep.subr.mxu0 0.0
    %674 = vmatpush1.msra.mxu0 0.0
    %675 = vmatprep.subr.mxu0 0.0
    %676 = vmatpush1.msra.mxu0 0.0
    %677 = vmatprep.mubr.f32.mxu0 0.0
    %678 = vmatmul.mubr.f32.gmra.mrb[0].mxu0 %v593
    %v679 = vpop.f32.mrb[0].mxu0
    %v680 = vadd.f32 0.0, %v679
    %v681 = vpop.f32.mrb[0].mxu0
    %682 = vmatprep.mubr.f32.mxu0 0.0
    %683 = vmatmul.mubr.f32.gmra.mrb[0].mxu0 %v594
    %v684 = vpop.f32.mrb[0].mxu0
    %v685 = vadd.f32 0.0, %v684
    %v686 = vpop.f32.mrb[0].mxu0
    %687 = vmatprep.mubr.f32.mxu0 0.0
    %688 = vmatmul.mubr.f32.gmra.mrb[0].mxu0 %v595
    %v689 = vpop.f32.mrb[0].mxu0
    %v690 = vadd.f32 0.0, %v689
    %v691 = vpop.f32.mrb[0].mxu0
    %692 = vmatprep.mubr.f32.mxu0 0.0
    %693 = vmatmul.mubr.f32.gmra.mrb[0].mxu0 %v596
    %v694 = vpop.f32.mrb[0].mxu0
    %v695 = vadd.f32 0.0, %v694
    %v696 = vpop.f32.mrb[0].mxu0
    %697 = vdwg.mxu0
    %v698 = vadd.f32 %v559, %v680
    %v699 = vadd.f32 %v564, %v685
    %v700 = vadd.f32 %v569, %v690
    %v701 = vadd.f32 %v574, %v695
    %v702 = vmul.f32 %v51, %v698
    %v703 = vmul.f32 %v56, %v699
    %v704 = vmul.f32 %v61, %v700
    %v705 = vmul.f32 %v66, %v701
    %v706 = vtanh.pop %v702
    %v707 = vtanh.pop %v703
    %v708 = vtanh.pop %v704
    %v709 = vtanh.pop %v705
    %v710 = vmul.f32 %v470, 0.5
    %v711 = vmul.f32 %v476, 0.5
    %v712 = vmul.f32 %v482, 0.5
    %v713 = vmul.f32 %v488, 0.5
    %v714 = vtanh.pop %v710
    %v715 = vtanh.pop %v711
    %v716 = vtanh.pop %v712
    %v717 = vtanh.pop %v713
    %v718 = vadd.f32 %v714, 1.0
    %v719 = vadd.f32 %v715, 1.0
    %v720 = vadd.f32 %v716, 1.0
    %v721 = vadd.f32 %v717, 1.0
    %v722 = vmul.f32 %v718, 0.5
    %v723 = vmul.f32 %v719, 0.5
    %v724 = vmul.f32 %v720, 0.5
    %v725 = vmul.f32 %v721, 0.5
    %v726 = vsub.f32 %v706, %v184
    %v727 = vsub.f32 %v707, %v185
    %v728 = vsub.f32 %v708, %v186
    %v729 = vsub.f32 %v709, %v187
    %v730 = vmul.f32 %v722, %v726
    %v731 = vmul.f32 %v723, %v727
    %v732 = vmul.f32 %v724, %v728
    %v733 = vmul.f32 %v725, %v729
    %v734 = vadd.f32 %v184, %v730
    %v735 = vadd.f32 %v185, %v731
    %v736 = vadd.f32 %v186, %v732
    %v737 = vadd.f32 %v187, %v733
    %738 = vmatprep.subr.mxu0 0.0
    %739 = vmatpush1.msra.mxu0 %v734
    %740 = vmatprep.subr.mxu0 0.0
    %741 = vmatpush1.msra.mxu0 %v735
    %742 = vmatprep.subr.mxu0 0.0
    %743 = vmatpush1.msra.mxu0 %v736
    %744 = vmatprep.subr.mxu0 0.0
    %745 = vmatpush1.msra.mxu0 %v737
    %746 = vmatprep.subr.mxu0 0.0
    %747 = vmatpush1.msra.mxu0 0.0
    %748 = vmatprep.subr.mxu0 0.0
    %749 = vmatpush1.msra.mxu0 0.0
    %750 = vmatprep.subr.mxu0 0.0
    %751 = vmatpush1.msra.mxu0 0.0
    %752 = vmatprep.subr.mxu0 0.0
    %753 = vmatpush1.msra.mxu0 0.0
    %754 = vmatprep.subr.mxu0 0.0
    %755 = vmatpush1.msra.mxu0 0.0
    %756 = vmatprep.subr.mxu0 0.0
    %757 = vmatpush1.msra.mxu0 0.0
    %758 = vmatprep.subr.mxu0 0.0
    %759 = vmatpush1.msra.mxu0 0.0
    %760 = vmatprep.subr.mxu0 0.0
    %761 = vmatpush1.msra.mxu0 0.0
    %762 = vmatprep.subr.mxu0 0.0
    %763 = vmatpush1.msra.mxu0 0.0
    %764 = vmatprep.subr.mxu0 0.0
    %765 = vmatpush1.msra.mxu0 0.0
    %766 = vmatprep.subr.mxu0 0.0
    %767 = vmatpush1.msra.mxu0 0.0
    %768 = vmatprep.subr.mxu0 0.0
    %769 = vmatpush1.msra.mxu0 0.0
    %770 = vmatprep.subr.mxu0 0.0
    %771 = vmatpush1.msra.mxu0 0.0
    %772 = vmatprep.subr.mxu0 0.0
    %773 = vmatpush1.msra.mxu0 0.0
    %774 = vmatprep.subr.mxu0 0.0
    %775 = vmatpush1.msra.mxu0 0.0
    %776 = vmatprep.subr.mxu0 0.0
    %777 = vmatpush1.msra.mxu0 0.0
    %778 = vmatprep.subr.mxu0 0.0
    %779 = vmatpush1.msra.mxu0 0.0
    %780 = vmatprep.subr.mxu0 0.0
    %781 = vmatpush1.msra.mxu0 0.0
    %782 = vmatprep.subr.mxu0 0.0
    %783 = vmatpush1.msra.mxu0 0.0
    %784 = vmatprep.subr.mxu0 0.0
    %785 = vmatpush1.msra.mxu0 0.0
    %786 = vmatprep.subr.mxu0 0.0
    %787 = vmatpush1.msra.mxu0 0.0
    %788 = vmatprep.subr.mxu0 0.0
    %789 = vmatpush1.msra.mxu0 0.0
    %790 = vmatprep.subr.mxu0 0.0
    %791 = vmatpush1.msra.mxu0 0.0
    %792 = vmatprep.subr.mxu0 0.0
    %793 = vmatpush1.msra.mxu0 0.0
    %794 = vmatprep.subr.mxu0 0.0
    %795 = vmatpush1.msra.mxu0 0.0
    %796 = vmatprep.subr.mxu0 0.0
    %797 = vmatpush1.msra.mxu0 0.0
    %798 = vmatprep.subr.mxu0 0.0
    %799 = vmatpush1.msra.mxu0 0.0
    %800 = vmatprep.subr.mxu0 0.0
    %801 = vmatpush1.msra.mxu0 0.0
    %802 = vmatprep.mubr.f32.mxu0 0.0
    %803 = vmatmul.mubr.f32.gmra.mrb[0].mxu0 %v195
    %v804 = vpop.f32.mrb[0].mxu0
    %v805 = vadd.f32 0.0, %v804
    %v806 = vpop.f32.mrb[0].mxu0
    %807 = vmatprep.mubr.f32.mxu0 0.0
    %808 = vmatmul.mubr.f32.gmra.mrb[0].mxu0 %v198
    %v809 = vpop.f32.mrb[0].mxu0
    %v810 = vadd.f32 0.0, %v809
    %v811 = vpop.f32.mrb[0].mxu0
    %812 = vmatprep.mubr.f32.mxu0 0.0
    %813 = vmatmul.mubr.f32.gmra.mrb[0].mxu0 %v201
    %v814 = vpop.f32.mrb[0].mxu0
    %v815 = vadd.f32 0.0, %v814
    %v816 = vpop.f32.mrb[0].mxu0
    %817 = vmatprep.mubr.f32.mxu0 0.0
    %818 = vmatmul.mubr.f32.gmra.mrb[0].mxu0 %v204
    %v819 = vpop.f32.mrb[0].mxu0
    %v820 = vadd.f32 0.0, %v819
    %v821 = vpop.f32.mrb[0].mxu0
    %822 = vdwg.mxu0
    %823 = vmatprep.subr.mxu0 %v292
    %824 = vmatpush1.msra.mxu0 %v291
    %825 = vmatprep.subr.mxu0 %v295
    %826 = vmatpush1.msra.mxu0 %v294
    %827 = vmatprep.subr.mxu0 %v298
    %828 = vmatpush1.msra.mxu0 %v297
    %829 = vmatprep.subr.mxu0 %v301
    %830 = vmatpush1.msra.mxu0 %v300
    %831 = vmatprep.subr.mxu0 %v304
    %832 = vmatpush1.msra.mxu0 %v303
    %833 = vmatprep.subr.mxu0 %v307
    %834 = vmatpush1.msra.mxu0 %v306
    %835 = vmatprep.subr.mxu0 %v310
    %836 = vmatpush1.msra.mxu0 %v309
    %837 = vmatprep.subr.mxu0 %v313
    %838 = vmatpush1.msra.mxu0 %v312
    %839 = vmatprep.subr.mxu0 %v316
    %840 = vmatpush1.msra.mxu0 %v315
    %841 = vmatprep.subr.mxu0 %v319
    %842 = vmatpush1.msra.mxu0 %v318
    %843 = vmatprep.subr.mxu0 %v322
    %844 = vmatpush1.msra.mxu0 %v321
    %845 = vmatprep.subr.mxu0 %v325
    %846 = vmatpush1.msra.mxu0 %v324
    %847 = vmatprep.subr.mxu0 %v328
    %848 = vmatpush1.msra.mxu0 %v327
    %849 = vmatprep.subr.mxu0 %v331
    %850 = vmatpush1.msra.mxu0 %v330
    %851 = vmatprep.subr.mxu0 %v334
    %852 = vmatpush1.msra.mxu0 %v333
    %853 = vmatprep.subr.mxu0 %v337
    %854 = vmatpush1.msra.mxu0 %v336
    %855 = vmatprep.subr.mxu0 %v340
    %856 = vmatpush1.msra.mxu0 %v339
    %857 = vmatprep.subr.mxu0 %v343
    %858 = vmatpush1.msra.mxu0 %v342
    %859 = vmatprep.subr.mxu0 %v346
    %860 = vmatpush1.msra.mxu0 %v345
    %861 = vmatprep.subr.mxu0 %v349
    %862 = vmatpush1.msra.mxu0 %v348
    %863 = vmatprep.subr.mxu0 %v352
    %864 = vmatpush1.msra.mxu0 %v351
    %865 = vmatprep.subr.mxu0 %v355
    %866 = vmatpush1.msra.mxu0 %v354
    %867 = vmatprep.subr.mxu0 %v358
    %868 = vmatpush1.msra.mxu0 %v357
    %869 = vmatprep.subr.mxu0 %v361
    %870 = vmatpush1.msra.mxu0 %v360
    %871 = vmatprep.subr.mxu0 %v364
    %872 = vmatpush1.msra.mxu0 %v363
    %873 = vmatprep.subr.mxu0 %v367
    %874 = vmatpush1.msra.mxu0 %v366
    %875 = vmatprep.subr.mxu0 %v370
    %876 = vmatpush1.msra.mxu0 %v369
    %877 = vmatprep.subr.mxu0 %v373
    %878 = vmatpush1.msra.mxu0 %v372
    %879 = vmatprep.subr.mxu0 %v376
    %880 = vmatpush1.msra.mxu0 %v375
    %881 = vmatprep.subr.mxu0 %v379
    %882 = vmatpush1.msra.mxu0 %v378
    %883 = vmatprep.subr.mxu0 %v382
    %884 = vmatpush1.msra.mxu0 %v381
    %885 = vmatprep.subr.mxu0 %v385
    %886 = vmatpush1.msra.mxu0 %v384
    %887 = vmatprep.mubr.f32.mxu0 %v734
    %888 = vmatmul.mubr.f32.gmra.mrb[0].mxu0 %v805
    %v889 = vpop.f32.mrb[0].mxu0
    %v890 = vadd.f32 %v391, %v889
    %v891 = vpop.f32.mrb[0].mxu0
    %v892 = vadd.f32 %v395, %v891
    %893 = vmatprep.mubr.f32.mxu0 %v735
    %894 = vmatmul.mubr.f32.gmra.mrb[0].mxu0 %v810
    %v895 = vpop.f32.mrb[0].mxu0
    %v896 = vadd.f32 %v391, %v895
    %v897 = vpop.f32.mrb[0].mxu0
    %v898 = vadd.f32 %v395, %v897
    %899 = vmatprep.mubr.f32.mxu0 %v736
    %900 = vmatmul.mubr.f32.gmra.mrb[0].mxu0 %v815
    %v901 = vpop.f32.mrb[0].mxu0
    %v902 = vadd.f32 %v391, %v901
    %v903 = vpop.f32.mrb[0].mxu0
    %v904 = vadd.f32 %v395, %v903
    %905 = vmatprep.mubr.f32.mxu0 %v737
    %906 = vmatmul.mubr.f32.gmra.mrb[0].mxu0 %v820
    %v907 = vpop.f32.mrb[0].mxu0
    %v908 = vadd.f32 %v391, %v907
    %v909 = vpop.f32.mrb[0].mxu0
    %v910 = vadd.f32 %v395, %v909
    %911 = vdwg.mxu0
    %912 = vmatprep.subr.mxu0 0.0
    %913 = vmatpush1.msra.mxu0 %v293
    %914 = vmatprep.subr.mxu0 0.0
    %915 = vmatpush1.msra.mxu0 %v296
    %916 = vmatprep.subr.mxu0 0.0
    %917 = vmatpush1.msra.mxu0 %v299
    %918 = vmatprep.subr.mxu0 0.0
    %919 = vmatpush1.msra.mxu0 %v302
    %920 = vmatprep.subr.mxu0 0.0
    %921 = vmatpush1.msra.mxu0 %v305
    %922 = vmatprep.subr.mxu0 0.0
    %923 = vmatpush1.msra.mxu0 %v308
    %924 = vmatprep.subr.mxu0 0.0
    %925 = vmatpush1.msra.mxu0 %v311
    %926 = vmatprep.subr.mxu0 0.0
    %927 = vmatpush1.msra.mxu0 %v314
    %928 = vmatprep.subr.mxu0 0.0
    %929 = vmatpush1.msra.mxu0 %v317
    %930 = vmatprep.subr.mxu0 0.0
    %931 = vmatpush1.msra.mxu0 %v320
    %932 = vmatprep.subr.mxu0 0.0
    %933 = vmatpush1.msra.mxu0 %v323
    %934 = vmatprep.subr.mxu0 0.0
    %935 = vmatpush1.msra.mxu0 %v326
    %936 = vmatprep.subr.mxu0 0.0
    %937 = vmatpush1.msra.mxu0 %v329
    %938 = vmatprep.subr.mxu0 0.0
    %939 = vmatpush1.msra.mxu0 %v332
    %940 = vmatprep.subr.mxu0 0.0
    %941 = vmatpush1.msra.mxu0 %v335
    %942 = vmatprep.subr.mxu0 0.0
    %943 = vmatpush1.msra.mxu0 %v338
    %944 = vmatprep.subr.mxu0 0.0
    %945 = vmatpush1.msra.mxu0 %v341
    %946 = vmatprep.subr.mxu0 0.0
    %947 = vmatpush1.msra.mxu0 %v344
    %948 = vmatprep.subr.mxu0 0.0
    %949 = vmatpush1.msra.mxu0 %v347
    %950 = vmatprep.subr.mxu0 0.0
    %951 = vmatpush1.msra.mxu0 %v350
    %952 = vmatprep.subr.mxu0 0.0
    %953 = vmatpush1.msra.mxu0 %v353
    %954 = vmatprep.subr.mxu0 0.0
    %955 = vmatpush1.msra.mxu0 %v356
    %956 = vmatprep.subr.mxu0 0.0
    %957 = vmatpush1.msra.mxu0 %v359
    %958 = vmatprep.subr.mxu0 0.0
    %959 = vmatpush1.msra.mxu0 %v362
    %960 = vmatprep.subr.mxu0 0.0
    %961 = vmatpush1.msra.mxu0 %v365
    %962 = vmatprep.subr.mxu0 0.0
    %963 = vmatpush1.msra.mxu0 %v368
    %964 = vmatprep.subr.mxu0 0.0
    %965 = vmatpush1.msra.mxu0 %v371
    %966 = vmatprep.subr.mxu0 0.0
    %967 = vmatpush1.msra.mxu0 %v374
    %968 = vmatprep.subr.mxu0 0.0
    %969 = vmatpush1.msra.mxu0 %v377
    %970 = vmatprep.subr.mxu0 0.0
    %971 = vmatpush1.msra.mxu0 %v380
    %972 = vmatprep.subr.mxu0 0.0
    %973 = vmatpush1.msra.mxu0 %v383
    %974 = vmatprep.subr.mxu0 0.0
    %975 = vmatpush1.msra.mxu0 %v386
    %976 = vmatprep.mubr.f32.mxu0 %v734
    %977 = vmatmul.mubr.f32.gmra.mrb[0].mxu0 %v805
    %v978 = vpop.f32.mrb[0].mxu0
    %v979 = vadd.f32 %v399, %v978
    %v980 = vpop.f32.mrb[0].mxu0
    %981 = vmatprep.mubr.f32.mxu0 %v735
    %982 = vmatmul.mubr.f32.gmra.mrb[0].mxu0 %v810
    %v983 = vpop.f32.mrb[0].mxu0
    %v984 = vadd.f32 %v399, %v983
    %v985 = vpop.f32.mrb[0].mxu0
    %986 = vmatprep.mubr.f32.mxu0 %v736
    %987 = vmatmul.mubr.f32.gmra.mrb[0].mxu0 %v815
    %v988 = vpop.f32.mrb[0].mxu0
    %v989 = vadd.f32 %v399, %v988
    %v990 = vpop.f32.mrb[0].mxu0
    %991 = vmatprep.mubr.f32.mxu0 %v737
    %992 = vmatmul.mubr.f32.gmra.mrb[0].mxu0 %v820
    %v993 = vpop.f32.mrb[0].mxu0
    %v994 = vadd.f32 %v399, %v993
    %v995 = vpop.f32.mrb[0].mxu0
    %996 = vdwg.mxu0
    %v997 = vmul.f32 %v892, 0.5
    %v998 = vmul.f32 %v898, 0.5
    %v999 = vmul.f32 %v904, 0.5
    %v1000 = vmul.f32 %v910, 0.5
    %v1001 = vtanh.pop %v997
    %v1002 = vtanh.pop %v998
    %v1003 = vtanh.pop %v999
    %v1004 = vtanh.pop %v1000
    %v1005 = vadd.f32 %v1001, 1.0
    %v1006 = vadd.f32 %v1002, 1.0
    %v1007 = vadd.f32 %v1003, 1.0
    %v1008 = vadd.f32 %v1004, 1.0
    %v1009 = vmul.f32 %v1005, 0.5
    %v1010 = vmul.f32 %v1006, 0.5
    %v1011 = vmul.f32 %v1007, 0.5
    %v1012 = vmul.f32 %v1008, 0.5
    %v1013 = vmul.f32 %v1009, %v734
    %v1014 = vmul.f32 %v1010, %v735
    %v1015 = vmul.f32 %v1011, %v736
    %v1016 = vmul.f32 %v1012, %v737
    %1017 = vmatprep.subr.mxu0 0.0
    %1018 = vmatpush1.msra.mxu0 %v597
    %1019 = vmatprep.subr.mxu0 0.0
    %1020 = vmatpush1.msra.mxu0 %v598
    %1021 = vmatprep.subr.mxu0 0.0
    %1022 = vmatpush1.msra.mxu0 %v599
    %1023 = vmatprep.subr.mxu0 0.0
    %1024 = vmatpush1.msra.mxu0 %v600
    %1025 = vmatprep.subr.mxu0 0.0
    %1026 = vmatpush1.msra.mxu0 %v601
    %1027 = vmatprep.subr.mxu0 0.0
    %1028 = vmatpush1.msra.mxu0 %v602
    %1029 = vmatprep.subr.mxu0 0.0
    %1030 = vmatpush1.msra.mxu0 %v603
    %1031 = vmatprep.subr.mxu0 0.0
    %1032 = vmatpush1.msra.mxu0 %v604
    %1033 = vmatprep.subr.mxu0 0.0
    %1034 = vmatpush1.msra.mxu0 %v605
    %1035 = vmatprep.subr.mxu0 0.0
    %1036 = vmatpush1.msra.mxu0 %v606
    %1037 = vmatprep.subr.mxu0 0.0
    %1038 = vmatpush1.msra.mxu0 %v607
    %1039 = vmatprep.subr.mxu0 0.0
    %1040 = vmatpush1.msra.mxu0 %v608
    %1041 = vmatprep.subr.mxu0 0.0
    %1042 = vmatpush1.msra.mxu0 %v609
    %1043 = vmatprep.subr.mxu0 0.0
    %1044 = vmatpush1.msra.mxu0 %v610
    %1045 = vmatprep.subr.mxu0 0.0
    %1046 = vmatpush1.msra.mxu0 %v611
    %1047 = vmatprep.subr.mxu0 0.0
    %1048 = vmatpush1.msra.mxu0 %v612
    %1049 = vmatprep.subr.mxu0 0.0
    %1050 = vmatpush1.msra.mxu0 0.0
    %1051 = vmatprep.subr.mxu0 0.0
    %1052 = vmatpush1.msra.mxu0 0.0
    %1053 = vmatprep.subr.mxu0 0.0
    %1054 = vmatpush1.msra.mxu0 0.0
    %1055 = vmatprep.subr.mxu0 0.0
    %1056 = vmatpush1.msra.mxu0 0.0
    %1057 = vmatprep.subr.mxu0 0.0
    %1058 = vmatpush1.msra.mxu0 0.0
    %1059 = vmatprep.subr.mxu0 0.0
    %1060 = vmatpush1.msra.mxu0 0.0
    %1061 = vmatprep.subr.mxu0 0.0
    %1062 = vmatpush1.msra.mxu0 0.0
    %1063 = vmatprep.subr.mxu0 0.0
    %1064 = vmatpush1.msra.mxu0 0.0
    %1065 = vmatprep.subr.mxu0 0.0
    %1066 = vmatpush1.msra.mxu0 0.0
    %1067 = vmatprep.subr.mxu0 0.0
    %1068 = vmatpush1.msra.mxu0 0.0
    %1069 = vmatprep.subr.mxu0 0.0
    %1070 = vmatpush1.msra.mxu0 0.0
    %1071 = vmatprep.subr.mxu0 0.0
    %1072 = vmatpush1.msra.mxu0 0.0
    %1073 = vmatprep.subr.mxu0 0.0
    %1074 = vmatpush1.msra.mxu0 0.0
    %1075 = vmatprep.subr.mxu0 0.0
    %1076 = vmatpush1.msra.mxu0 0.0
    %1077 = vmatprep.subr.mxu0 0.0
    %1078 = vmatpush1.msra.mxu0 0.0
    %1079 = vmatprep.subr.mxu0 0.0
    %1080 = vmatpush1.msra.mxu0 0.0
    %1081 = vmatprep.mubr.f32.mxu0 0.0
    %1082 = vmatmul.mubr.f32.gmra.mrb[0].mxu0 %v1013
    %v1083 = vpop.f32.mrb[0].mxu0
    %v1084 = vadd.f32 0.0, %v1083
    %v1085 = vpop.f32.mrb[0].mxu0
    %1086 = vmatprep.mubr.f32.mxu0 0.0
    %1087 = vmatmul.mubr.f32.gmra.mrb[0].mxu0 %v1014
    %v1088 = vpop.f32.mrb[0].mxu0
    %v1089 = vadd.f32 0.0, %v1088
    %v1090 = vpop.f32.mrb[0].mxu0
    %1091 = vmatprep.mubr.f32.mxu0 0.0
    %1092 = vmatmul.mubr.f32.gmra.mrb[0].mxu0 %v1015
    %v1093 = vpop.f32.mrb[0].mxu0
    %v1094 = vadd.f32 0.0, %v1093
    %v1095 = vpop.f32.mrb[0].mxu0
    %1096 = vmatprep.mubr.f32.mxu0 0.0
    %1097 = vmatmul.mubr.f32.gmra.mrb[0].mxu0 %v1016
    %v1098 = vpop.f32.mrb[0].mxu0
    %v1099 = vadd.f32 0.0, %v1098
    %v1100 = vpop.f32.mrb[0].mxu0
    %1101 = vdwg.mxu0
    %v1102 = vadd.f32 %v979, %v1084
    %v1103 = vadd.f32 %v984, %v1089
    %v1104 = vadd.f32 %v989, %v1094
    %v1105 = vadd.f32 %v994, %v1099
    %v1106 = vmul.f32 %v51, %v1102
    %v1107 = vmul.f32 %v56, %v1103
    %v1108 = vmul.f32 %v61, %v1104
    %v1109 = vmul.f32 %v66, %v1105
    %v1110 = vtanh.pop %v1106
    %v1111 = vtanh.pop %v1107
    %v1112 = vtanh.pop %v1108
    %v1113 = vtanh.pop %v1109
    %v1114 = vmul.f32 %v890, 0.5
    %v1115 = vmul.f32 %v896, 0.5
    %v1116 = vmul.f32 %v902, 0.5
    %v1117 = vmul.f32 %v908, 0.5
    %v1118 = vtanh.pop %v1114
    %v1119 = vtanh.pop %v1115
    %v1120 = vtanh.pop %v1116
    %v1121 = vtanh.pop %v1117
    %v1122 = vadd.f32 %v1118, 1.0
    %v1123 = vadd.f32 %v1119, 1.0
    %v1124 = vadd.f32 %v1120, 1.0
    %v1125 = vadd.f32 %v1121, 1.0
    %v1126 = vmul.f32 %v1122, 0.5
    %v1127 = vmul.f32 %v1123, 0.5
    %v1128 = vmul.f32 %v1124, 0.5
    %v1129 = vmul.f32 %v1125, 0.5
    %v1130 = vsub.f32 %v1110, %v734
    %v1131 = vsub.f32 %v1111, %v735
    %v1132 = vsub.f32 %v1112, %v736
    %v1133 = vsub.f32 %v1113, %v737
    %v1134 = vmul.f32 %v1126, %v1130
    %v1135 = vmul.f32 %v1127, %v1131
    %v1136 = vmul.f32 %v1128, %v1132
    %v1137 = vmul.f32 %v1129, %v1133
    %v1138 = vadd.f32 %v734, %v1134
    %v1139 = vadd.f32 %v735, %v1135
    %v1140 = vadd.f32 %v736, %v1136
    %v1141 = vadd.f32 %v737, %v1137
    %1142 = vst [vmem:[#allocation5] sm:$0xff] %v1138
    %1143 = vst [vmem:[#allocation5 + $0x8] sm:$0xff] %v1139
    %1144 = vst [vmem:[#allocation5 + $0x10] sm:$0xff] %v1140
    %1145 = vst [vmem:[#allocation5 + $0x18] sm:$0xff] %v1141
    // Predicated region
    $region38: #{_graph_layer_forward.1} parent=1 // pred_check
      _
    $region39: #{_graph_layer_forward.1} parent=1 // pred_check_branch
      %1147 = sbr.rel (0) target = $region41
    $region40: #{_graph_layer_forward.1} parent=1 // pred_region
      %s1149 = ssub.s32 512, 512
      %1150 = vsyncadd [#allocation4], %s1149
      %s1151 = sshll.u32 [#allocation5], 4
      %s1152 = int_to_ptr.vmem [resolvable:$true] %s1151
      %1157 = dma.vmem_to_hbm [thread:$0]  %s1152, 512, %s8, [#allocation4], 128, 128, 8
    $region41: #{_graph_layer_forward.1} parent=1 // pred_fallthru
      _
    // Predicated region
    $region42: #{_graph_layer_forward.1} parent=1 // pred_check
      _
    $region43: #{_graph_layer_forward.1} parent=1 // pred_check_branch
      %1159 = sbr.rel (0) target = $region45
    $region44: #{_graph_layer_forward.1} parent=1 // pred_region
      %1160 = dma.done [#allocation4], 512
    $region45: #{_graph_layer_forward.1} parent=1 // pred_fallthru
      _
    %1161 = vsyncpa [#allocation3], 1
    %1162 = vsyncpa [#allocation4], 1

</llo_original>
